<compile_context>
chip_gen: v7x
topology: tpu7x:2x2x1
jax: 0.10.0
libtpu: 0.0.40
codegen_flags: <defaults>
</compile_context>

<pallas_src>
import functools

import jax
import jax.numpy as jnp
from jax import lax
from jax.experimental import pallas as pl
from jax.experimental.pallas import tpu as pltpu

FILTER_LEN = 5
PAD = FILTER_LEN // 2
NEG_SLOPE = 0.01  # LeakyReLU default
EPS = 1e-5


def _leaky(x):
    return jnp.where(x > 0, x, NEG_SLOPE * x)


def _tap_shift(k, width, hw):
    """Lane roll + valid-lane bounds for conv tap k on the flattened H*W axis.

    Tap k needs h[i + d] with d = (k - PAD) * width (whole H rows), zero outside
    the H range.  pltpu.roll(h, s)[i] == h[(i - s) mod hw], so s = (-d) mod hw
    reproduces h[i + d] on the valid lanes lo <= i < hi.
    """
    d = (k - PAD) * width
    s = (-d) % hw
    lo = max(0, -d)
    hi = min(hw, hw - d)
    return s, lo, hi


def dense_filter_kernel_vpu(x_ref, s1_ref, t1_ref, w1_ref, t2_ref, w2_ref,
                            b2_ref, o_ref, h_scr, *, width, bt):
    """Small-channel path: all math stays f32 on the VPU (no MXU, no bf16).

    x_ref : (bt, Cin, HW)   native dtype      s1/t1 : (Cin, 1) f32
    w1_ref: (Cin, Cb, 1)    f32 (BN2 scale folded in)
    t2_ref: (Cb, 1)         f32 (conv1 bias folded in)
    w2_ref: (5, Cb, Cg, 1)  f32               b2    : (Cg, 1)  f32
    o_ref : (bt, Cin+Cg, HW) same dtype as x  h_scr : (Cb, HW) f32 VMEM scratch
    """
    cin = s1_ref.shape[0]
    cb = t2_ref.shape[0]
    cg = b2_ref.shape[0]
    hw = x_ref.shape[2]
    lane = lax.broadcasted_iota(jnp.int32, (1, hw), 1)

    for b in range(bt):
        # Fused channel concat: lane-dense slice store of the passthrough rows,
        # no concat temporary, no dtype round-trip.
        o_ref[b, 0:cin, :] = x_ref[b]

        # BN1 + LeakyReLU + 1x1 conv (BN2 scale folded) as Cin broadcast-FMA
        # outer products; rows are read straight from the refs.
        h = jnp.zeros((cb, hw), jnp.float32)
        for c in range(cin):
            xc = x_ref[b, c:c + 1, :].astype(jnp.float32)            # (1, HW)
            ac = _leaky(xc * s1_ref[c:c + 1, :] + t1_ref[c:c + 1, :])
            h = h + w1_ref[c] * ac                                   # (Cb,1)*(1,HW)
        # BN2 shift (+ folded conv1 bias) + LeakyReLU; park in VMEM scratch so
        # the (5,1)-conv loop reads rows from a ref.
        h_scr[...] = _leaky(h + t2_ref[...])

        # (5,1) conv along H with zero padding: per tap, roll each bottleneck row
        # by a whole number of H rows (XLU) and accumulate Cg broadcast-FMAs;
        # one boundary mask per tap.
        y = jnp.zeros((cg, hw), jnp.float32)
        for k in range(FILTER_LEN):
            s, lo, hi = _tap_shift(k, width, hw)
            if hi <= lo:          # tap entirely outside (degenerate small H)
                continue
            acc = jnp.zeros((cg, hw), jnp.float32)
            for c in range(cb):
                row = h_scr[c:c + 1, :]                              # (1, HW)
                if s:
                    row = pltpu.roll(row, s, 1)
                acc = acc + w2_ref[k, c] * row                       # (Cg,1)*(1,HW)
            if lo > 0 or hi < hw:
                acc = jnp.where((lane >= lo) & (lane < hi), acc, 0.0)
            y = y + acc
        o_ref[b, cin:cin + cg, :] = (y + b2_ref[...]).astype(o_ref.dtype)


def dense_filter_kernel_mxu(x_ref, s1_ref, t1_ref, w1_ref, t2_ref, w2_ref,
                            b2_ref, o_ref, *, width, bt):
    """Large-channel path: bf16 MXU matmuls with f32 accumulation.

    x_ref : (bt, Cin, HW)  native dtype       s1/t1 : (Cin, 1) f32
    w1_ref: (Cb, Cin)      bf16 (BN2 scale folded in)
    t2_ref: (Cb, 1)        f32  (conv1 bias folded in)
    w2_ref: (5, Cg, Cb)    bf16               b2    : (Cg, 1)  f32
    o_ref : (bt, Cin+Cg, HW) same dtype as x
    """
    cin = s1_ref.shape[0]
    cg = b2_ref.shape[0]
    hw = x_ref.shape[2]
    lane = lax.broadcasted_iota(jnp.int32, (1, hw), 1)

    for b in range(bt):
        xb = x_ref[b]                                                # (Cin, HW)
        o_ref[b, 0:cin, :] = xb                                      # passthrough

        a = _leaky(xb.astype(jnp.float32) * s1_ref[...] + t1_ref[...])
        h = jnp.dot(w1_ref[...], a.astype(w1_ref.dtype),
                    preferred_element_type=jnp.float32)              # (Cb, HW)
        h = _leaky(h + t2_ref[...])                                  # f32

        # (5,1) conv: 5 accumulating K=Cb dots against rolled + masked h.  Rolls
        # stay f32 (portable lane rotate); the bf16 cast feeds the MXU directly
        # -- there is no im2col slab and no lane-unaligned slice copies.
        y = jnp.zeros((cg, hw), jnp.float32)
        for k in range(FILTER_LEN):
            s, lo, hi = _tap_shift(k, width, hw)
            if hi <= lo:
                continue
            hk = pltpu.roll(h, s, 1) if s else h
            pk = jnp.dot(w2_ref[k], hk.astype(w2_ref.dtype),
                         preferred_element_type=jnp.float32)         # (Cg, HW)
            if lo > 0 or hi < hw:
                pk = jnp.where((lane >= lo) & (lane < hi), pk, 0.0)
            y = y + pk
        o_ref[b, cin:cin + cg, :] = (y + b2_ref[...]).astype(o_ref.dtype)


def dense_filter_forward(x_nchw, params, *, batch_tile=1, force_path=None):
    """DenseFilter forward (eval mode): concat((x, net(x)), channel axis), NCHW."""
    (s1, t1, w1, b1, s2, t2, w2, b2) = params
    N, Cin, H, W = x_nchw.shape
    HW = H * W
    Cb = w1.shape[0]            # w1: (Cb, Cin)
    Cg = w2.shape[0]            # w2: (Cg, Cb, FILTER_LEN)

    bt = batch_tile if (batch_tile > 0 and N % batch_tile == 0) else 1
    grid = (N // bt,)

    # MXU only pays once both contraction dims stop drowning in K padding
    # (MXU is 256 wide on v6e/v7x); below that a broadcast-FMA VPU path wins and
    # keeps everything f32 (also avoids bf16 casts on v5e's f32-only VPU).
    if force_path is None:
        use_mxu = min(Cin, Cb) >= 32
    else:
        use_mxu = (force_path == "mxu")

    # --- trace-time folding (exact, linear; no in-kernel cost) --------------
    w1f = w1 * s2[:, None]                                        # BN2 scale -> conv1 w
    t2f = (b1 * s2 + t2).reshape(Cb, 1).astype(jnp.float32)       # BN2 shift (+ conv1 bias)
    s1c = s1.reshape(Cin, 1).astype(jnp.float32)
    t1c = t1.reshape(Cin, 1).astype(jnp.float32)
    b2c = b2.reshape(Cg, 1).astype(jnp.float32)

    if use_mxu:
        kernel = dense_filter_kernel_mxu
        w1k = w1f.astype(jnp.bfloat16)                             # (Cb, Cin)
        w2k = jnp.transpose(w2, (2, 0, 1)).astype(jnp.bfloat16)    # (5, Cg, Cb)
        scratch = []
    else:
        kernel = dense_filter_kernel_vpu
        w1k = w1f.T.reshape(Cin, Cb, 1).astype(jnp.float32)        # (Cin, Cb, 1)
        w2k = (jnp.transpose(w2, (2, 1, 0))                        # (5, Cb, Cg)
               .reshape(FILTER_LEN, Cb, Cg, 1).astype(jnp.float32))
        scratch = [pltpu.VMEM((Cb, HW), jnp.float32)]

    # Free reshape of contiguous NCHW puts flattened H*W on the lane axis; no
    # dtype upcast in the wrapper -- the kernel reads the native dtype.
    x2 = x_nchw.reshape(N, Cin, HW)
    out_dtype = x_nchw.dtype
    xbytes = jnp.dtype(out_dtype).itemsize

    full = lambda a: pl.BlockSpec(a.shape, lambda n: (0,) * a.ndim)

    # Advisory cost + explicit VMEM budget (with headroom) for the scheduler.
    flops = 2 * N * HW * (Cb * Cin + FILTER_LEN * Cb * Cg)
    bytes_accessed = N * HW * xbytes * (2 * Cin + Cg) + sum(
        int(a.size) * a.dtype.itemsize for a in (w1k, w2k, s1c, t1c, t2f, b2c))
    blk_bytes = bt * HW * xbytes * (2 * Cin + Cg)                  # in + out block
    work_bytes = bt * HW * 4 * (3 * Cb + 2 * Cg + 2)               # f32 intermediates
    vmem_limit = int(min(max(4 * (2 * blk_bytes + work_bytes), 8 << 20), 32 << 20))

    out = pl.pallas_call(
        functools.partial(kernel, width=W, bt=bt),
        out_shape=jax.ShapeDtypeStruct((N, Cin + Cg, HW), out_dtype),
        grid=grid,
        in_specs=[
            pl.BlockSpec((bt, Cin, HW), lambda n: (n, 0, 0)),      # x
            full(s1c),          # BN1 scale
            full(t1c),          # BN1 shift
            full(w1k),          # 1x1 conv weight (BN2 scale folded)
            full(t2f),          # BN2 shift (+ conv1 bias folded)
            full(w2k),          # (5,1) conv weight
            full(b2c),          # (5,1) conv bias
        ],
        out_specs=pl.BlockSpec((bt, Cin + Cg, HW), lambda n: (n, 0, 0)),
        scratch_shapes=scratch,
        compiler_params=pltpu.CompilerParams(
            dimension_semantics=("parallel",),
            vmem_limit_bytes=vmem_limit),
        cost_estimate=pl.CostEstimate(
            flops=flops, transcendentals=0, bytes_accessed=bytes_accessed),
    )(x2, s1c, t1c, w1k, t2f, w2k, b2c)

    return out.reshape(N, Cin + Cg, H, W)


def make_params(key, in_features, growth_rate, bottleneck=2):
    Cin = in_features
    Cb = bottleneck * growth_rate
    Cg = growth_rate
    ks = jax.random.split(key, 12)

    # BN1 (eval mode): fold gamma/beta/mean/var into scale/shift.
    g1 = jax.random.uniform(ks[0], (Cin,), jnp.float32, 0.5, 1.5)
    be1 = 0.1 * jax.random.normal(ks[1], (Cin,), jnp.float32)
    m1 = 0.1 * jax.random.normal(ks[2], (Cin,), jnp.float32)
    v1 = jax.random.uniform(ks[3], (Cin,), jnp.float32, 0.5, 1.5)
    s1 = g1 / jnp.sqrt(v1 + EPS)
    t1 = be1 - m1 * s1

    # 1x1 conv: torch weight (Cb, Cin, 1, 1) -> (Cb, Cin).
    w1 = 0.1 * jax.random.normal(ks[4], (Cb, Cin), jnp.float32)
    b1 = 0.1 * jax.random.normal(ks[5], (Cb,), jnp.float32)

    # BN2
    g2 = jax.random.uniform(ks[6], (Cb,), jnp.float32, 0.5, 1.5)
    be2 = 0.1 * jax.random.normal(ks[7], (Cb,), jnp.float32)
    m2 = 0.1 * jax.random.normal(ks[8], (Cb,), jnp.float32)
    v2 = jax.random.uniform(ks[9], (Cb,), jnp.float32, 0.5, 1.5)
    s2 = g2 / jnp.sqrt(v2 + EPS)
    t2 = be2 - m2 * s2

    # (5,1) conv: torch weight (Cg, Cb, 5, 1) -> (Cg, Cb, 5).
    w2 = 0.1 * jax.random.normal(ks[10], (Cg, Cb, FILTER_LEN), jnp.float32)
    b2 = 0.1 * jax.random.normal(ks[11], (Cg,), jnp.float32)

    return (s1, t1, w1, b1, s2, t2, w2, b2)


def reference(x_nchw, params):
    """Pure-JAX NCHW mirror of the PyTorch forward (true f32 matmuls)."""
    (s1, t1, w1, b1, s2, t2, w2, b2) = params
    x = x_nchw.astype(jnp.float32)
    H = x.shape[2]
    bc = lambda v: v.reshape(1, -1, 1, 1)
    hp_prec = jax.lax.Precision.HIGHEST

    a = _leaky(x * bc(s1) + bc(t1))
    h = jnp.einsum('nchw,dc->ndhw', a, w1, precision=hp_prec,
                   preferred_element_type=jnp.float32) + bc(b1)
    h = _leaky(h * bc(s2) + bc(t2))
    hp = jnp.pad(h, ((0, 0), (0, 0), (PAD, PAD), (0, 0)))
    y = sum(jnp.einsum('nchw,dc->ndhw', hp[:, :, k:k + H, :], w2[:, :, k],
                       precision=hp_prec, preferred_element_type=jnp.float32)
            for k in range(FILTER_LEN)) + bc(b2)
    return jnp.concatenate([x, y], axis=1).astype(x_nchw.dtype)


if __name__ == "__main__":
    key = jax.random.PRNGKey(0)
    k_x, k_p = jax.random.split(key)

    # Small shapes consistent with the module (NCHW input).
    N, Cin, H, W = 2, 4, 16, 16
    growth_rate, bottleneck = 4, 2

    x = jax.random.normal(k_x, (N, Cin, H, W), jnp.float32)
    params = make_params(k_p, Cin, growth_rate, bottleneck)
    ref = reference(x, params)

    # Default (auto) path: tiny channel counts -> all-f32 VPU path, grid=(2,).
    fwd = jax.jit(functools.partial(dense_filter_forward, params=params))
    out = jax.block_until_ready(fwd(x))
    assert out.shape == (N, Cin + growth_rate, H, W), out.shape
    err = float(jnp.max(jnp.abs(out - ref)))
    assert jnp.allclose(out, ref, atol=1e-4, rtol=1e-4), err

    # Also exercise the MXU (bf16 matmul) path used at large channel counts.
    fwd_mxu = jax.jit(functools.partial(dense_filter_forward, params=params,
                                        force_path="mxu"))
    out_mxu = jax.block_until_ready(fwd_mxu(x))
    err_mxu = float(jnp.max(jnp.abs(out_mxu - ref)))
    assert jnp.allclose(out_mxu, ref, atol=5e-2, rtol=5e-2), err_mxu

    print("KERNEL_OK")
</pallas_src>

<mosaic_0001>
module attributes {stable_mosaic.version = 11 : i64} {
  func.func @dense_filter_kernel_vpu(%arg0: i32, %arg1: memref<1x4x256xf32, #tpu.memory_space<vmem>>, %arg2: memref<4x1xf32, #tpu.memory_space<vmem>>, %arg3: memref<4x1xf32, #tpu.memory_space<vmem>>, %arg4: memref<4x8x1xf32, #tpu.memory_space<vmem>>, %arg5: memref<8x1xf32, #tpu.memory_space<vmem>>, %arg6: memref<5x8x4x1xf32, #tpu.memory_space<vmem>>, %arg7: memref<4x1xf32, #tpu.memory_space<vmem>>, %arg8: memref<1x8x256xf32, #tpu.memory_space<vmem>>, %arg9: memref<8x256xf32, #tpu.memory_space<vmem>>) attributes {dimension_semantics = [#tpu.dimension_semantics<parallel>], iteration_bounds = array<i64: 2>, scalar_prefetch = 0 : i64, scratch_operands = 1 : i64, tpu.core_type = #tpu.core_type<tc>, window_params = [{transform_indices = @transform_0, window_bounds = array<i64: 1, 4, 256>}, {pipeline_mode = #tpu.pipeline_mode<synchronous>, transform_indices = @transform_1, window_bounds = array<i64: 4, 1>}, {pipeline_mode = #tpu.pipeline_mode<synchronous>, transform_indices = @transform_2, window_bounds = array<i64: 4, 1>}, {pipeline_mode = #tpu.pipeline_mode<synchronous>, transform_indices = @transform_3, window_bounds = array<i64: 4, 8, 1>}, {pipeline_mode = #tpu.pipeline_mode<synchronous>, transform_indices = @transform_4, window_bounds = array<i64: 8, 1>}, {pipeline_mode = #tpu.pipeline_mode<synchronous>, transform_indices = @transform_5, window_bounds = array<i64: 5, 8, 4, 1>}, {pipeline_mode = #tpu.pipeline_mode<synchronous>, transform_indices = @transform_6, window_bounds = array<i64: 4, 1>}, {transform_indices = @transform_7, window_bounds = array<i64: 1, 8, 256>}]} {
    %0 = tpu.iota {dimensions = array<i32: 1>} : vector<1x256xi32>
    %c0 = arith.constant 0 : index
    %c0_0 = arith.constant 0 : index
    %c0_1 = arith.constant 0 : index
    %1 = vector.load %arg1[%c0, %c0_0, %c0_1] : memref<1x4x256xf32, #tpu.memory_space<vmem>>, vector<1x4x256xf32>
    %2 = vector.shape_cast %1 : vector<1x4x256xf32> to vector<4x256xf32>
    %c0_2 = arith.constant 0 : index
    %c0_3 = arith.constant 0 : index
    %c0_4 = arith.constant 0 : index
    %3 = vector.load %arg8[%c0_2, %c0_3, %c0_4] : memref<1x8x256xf32, #tpu.memory_space<vmem>>, vector<1x4x256xf32>
    %4 = vector.shape_cast %3 : vector<1x4x256xf32> to vector<4x256xf32>
    %5 = vector.shape_cast %2 : vector<4x256xf32> to vector<1x4x256xf32>
    tpu.vector_store %arg8[%c0_2, %c0_3, %c0_4], %5 {strides = array<i32>} : memref<1x8x256xf32, #tpu.memory_space<vmem>>, vector<1x4x256xf32>,
    %cst = arith.constant 0.000000e+00 : f32
    %6 = vector.broadcast %cst : f32 to vector<8x256xf32>
    %c0_5 = arith.constant 0 : index
    %c0_6 = arith.constant 0 : index
    %c0_7 = arith.constant 0 : index
    %7 = vector.load %arg1[%c0_5, %c0_6, %c0_7] : memref<1x4x256xf32, #tpu.memory_space<vmem>>, vector<1x1x256xf32>
    %8 = vector.shape_cast %7 : vector<1x1x256xf32> to vector<1x256xf32>
    %c0_8 = arith.constant 0 : index
    %c0_9 = arith.constant 0 : index
    %9 = vector.load %arg2[%c0_8, %c0_9] : memref<4x1xf32, #tpu.memory_space<vmem>>, vector<1x1xf32>
    %10 = vector.broadcast %9 : vector<1x1xf32> to vector<1x256xf32>
    %11 = arith.mulf %8, %10 : vector<1x256xf32>
    %c0_10 = arith.constant 0 : index
    %c0_11 = arith.constant 0 : index
    %12 = vector.load %arg3[%c0_10, %c0_11] : memref<4x1xf32, #tpu.memory_space<vmem>>, vector<1x1xf32>
    %13 = vector.broadcast %12 : vector<1x1xf32> to vector<1x256xf32>
    %14 = arith.addf %11, %13 : vector<1x256xf32>
    %cst_12 = arith.constant 0.000000e+00 : f32
    %15 = vector.broadcast %cst_12 : f32 to vector<1x256xf32>
    %16 = arith.cmpf ogt, %14, %15 : vector<1x256xf32>
    %cst_13 = arith.constant 0.00999999977 : f32
    %17 = vector.broadcast %cst_13 : f32 to vector<1x256xf32>
    %18 = arith.mulf %17, %14 : vector<1x256xf32>
    %19 = arith.select %16, %14, %18 : vector<1x256xi1>, vector<1x256xf32>
    %c0_14 = arith.constant 0 : index
    %c0_15 = arith.constant 0 : index
    %c0_16 = arith.constant 0 : index
    %20 = vector.load %arg4[%c0_14, %c0_15, %c0_16] : memref<4x8x1xf32, #tpu.memory_space<vmem>>, vector<1x8x1xf32>
    %21 = vector.shape_cast %20 : vector<1x8x1xf32> to vector<8x1xf32>
    %22 = vector.broadcast %21 : vector<8x1xf32> to vector<8x256xf32>
    %23 = vector.broadcast %19 : vector<1x256xf32> to vector<8x256xf32>
    %24 = arith.mulf %22, %23 : vector<8x256xf32>
    %25 = arith.addf %6, %24 : vector<8x256xf32>
    %c0_17 = arith.constant 0 : index
    %c1 = arith.constant 1 : index
    %c0_18 = arith.constant 0 : index
    %26 = vector.load %arg1[%c0_17, %c1, %c0_18] : memref<1x4x256xf32, #tpu.memory_space<vmem>>, vector<1x1x256xf32>
    %27 = vector.shape_cast %26 : vector<1x1x256xf32> to vector<1x256xf32>
    %c1_19 = arith.constant 1 : index
    %c0_20 = arith.constant 0 : index
    %28 = vector.load %arg2[%c1_19, %c0_20] : memref<4x1xf32, #tpu.memory_space<vmem>>, vector<1x1xf32>
    %29 = vector.broadcast %28 : vector<1x1xf32> to vector<1x256xf32>
    %30 = arith.mulf %27, %29 : vector<1x256xf32>
    %c1_21 = arith.constant 1 : index
    %c0_22 = arith.constant 0 : index
    %31 = vector.load %arg3[%c1_21, %c0_22] : memref<4x1xf32, #tpu.memory_space<vmem>>, vector<1x1xf32>
    %32 = vector.broadcast %31 : vector<1x1xf32> to vector<1x256xf32>
    %33 = arith.addf %30, %32 : vector<1x256xf32>
    %cst_23 = arith.constant 0.000000e+00 : f32
    %34 = vector.broadcast %cst_23 : f32 to vector<1x256xf32>
    %35 = arith.cmpf ogt, %33, %34 : vector<1x256xf32>
    %cst_24 = arith.constant 0.00999999977 : f32
    %36 = vector.broadcast %cst_24 : f32 to vector<1x256xf32>
    %37 = arith.mulf %36, %33 : vector<1x256xf32>
    %38 = arith.select %35, %33, %37 : vector<1x256xi1>, vector<1x256xf32>
    %c1_25 = arith.constant 1 : index
    %c0_26 = arith.constant 0 : index
    %c0_27 = arith.constant 0 : index
    %39 = vector.load %arg4[%c1_25, %c0_26, %c0_27] : memref<4x8x1xf32, #tpu.memory_space<vmem>>, vector<1x8x1xf32>
    %40 = vector.shape_cast %39 : vector<1x8x1xf32> to vector<8x1xf32>
    %41 = vector.broadcast %40 : vector<8x1xf32> to vector<8x256xf32>
    %42 = vector.broadcast %38 : vector<1x256xf32> to vector<8x256xf32>
    %43 = arith.mulf %41, %42 : vector<8x256xf32>
    %44 = arith.addf %25, %43 : vector<8x256xf32>
    %c0_28 = arith.constant 0 : index
    %c2 = arith.constant 2 : index
    %c0_29 = arith.constant 0 : index
    %45 = vector.load %arg1[%c0_28, %c2, %c0_29] : memref<1x4x256xf32, #tpu.memory_space<vmem>>, vector<1x1x256xf32>
    %46 = vector.shape_cast %45 : vector<1x1x256xf32> to vector<1x256xf32>
    %c2_30 = arith.constant 2 : index
    %c0_31 = arith.constant 0 : index
    %47 = vector.load %arg2[%c2_30, %c0_31] : memref<4x1xf32, #tpu.memory_space<vmem>>, vector<1x1xf32>
    %48 = vector.broadcast %47 : vector<1x1xf32> to vector<1x256xf32>
    %49 = arith.mulf %46, %48 : vector<1x256xf32>
    %c2_32 = arith.constant 2 : index
    %c0_33 = arith.constant 0 : index
    %50 = vector.load %arg3[%c2_32, %c0_33] : memref<4x1xf32, #tpu.memory_space<vmem>>, vector<1x1xf32>
    %51 = vector.broadcast %50 : vector<1x1xf32> to vector<1x256xf32>
    %52 = arith.addf %49, %51 : vector<1x256xf32>
    %cst_34 = arith.constant 0.000000e+00 : f32
    %53 = vector.broadcast %cst_34 : f32 to vector<1x256xf32>
    %54 = arith.cmpf ogt, %52, %53 : vector<1x256xf32>
    %cst_35 = arith.constant 0.00999999977 : f32
    %55 = vector.broadcast %cst_35 : f32 to vector<1x256xf32>
    %56 = arith.mulf %55, %52 : vector<1x256xf32>
    %57 = arith.select %54, %52, %56 : vector<1x256xi1>, vector<1x256xf32>
    %c2_36 = arith.constant 2 : index
    %c0_37 = arith.constant 0 : index
    %c0_38 = arith.constant 0 : index
    %58 = vector.load %arg4[%c2_36, %c0_37, %c0_38] : memref<4x8x1xf32, #tpu.memory_space<vmem>>, vector<1x8x1xf32>
    %59 = vector.shape_cast %58 : vector<1x8x1xf32> to vector<8x1xf32>
    %60 = vector.broadcast %59 : vector<8x1xf32> to vector<8x256xf32>
    %61 = vector.broadcast %57 : vector<1x256xf32> to vector<8x256xf32>
    %62 = arith.mulf %60, %61 : vector<8x256xf32>
    %63 = arith.addf %44, %62 : vector<8x256xf32>
    %c0_39 = arith.constant 0 : index
    %c3 = arith.constant 3 : index
    %c0_40 = arith.constant 0 : index
    %64 = vector.load %arg1[%c0_39, %c3, %c0_40] : memref<1x4x256xf32, #tpu.memory_space<vmem>>, vector<1x1x256xf32>
    %65 = vector.shape_cast %64 : vector<1x1x256xf32> to vector<1x256xf32>
    %c3_41 = arith.constant 3 : index
    %c0_42 = arith.constant 0 : index
    %66 = vector.load %arg2[%c3_41, %c0_42] : memref<4x1xf32, #tpu.memory_space<vmem>>, vector<1x1xf32>
    %67 = vector.broadcast %66 : vector<1x1xf32> to vector<1x256xf32>
    %68 = arith.mulf %65, %67 : vector<1x256xf32>
    %c3_43 = arith.constant 3 : index
    %c0_44 = arith.constant 0 : index
    %69 = vector.load %arg3[%c3_43, %c0_44] : memref<4x1xf32, #tpu.memory_space<vmem>>, vector<1x1xf32>
    %70 = vector.broadcast %69 : vector<1x1xf32> to vector<1x256xf32>
    %71 = arith.addf %68, %70 : vector<1x256xf32>
    %cst_45 = arith.constant 0.000000e+00 : f32
    %72 = vector.broadcast %cst_45 : f32 to vector<1x256xf32>
    %73 = arith.cmpf ogt, %71, %72 : vector<1x256xf32>
    %cst_46 = arith.constant 0.00999999977 : f32
    %74 = vector.broadcast %cst_46 : f32 to vector<1x256xf32>
    %75 = arith.mulf %74, %71 : vector<1x256xf32>
    %76 = arith.select %73, %71, %75 : vector<1x256xi1>, vector<1x256xf32>
    %c3_47 = arith.constant 3 : index
    %c0_48 = arith.constant 0 : index
    %c0_49 = arith.constant 0 : index
    %77 = vector.load %arg4[%c3_47, %c0_48, %c0_49] : memref<4x8x1xf32, #tpu.memory_space<vmem>>, vector<1x8x1xf32>
    %78 = vector.shape_cast %77 : vector<1x8x1xf32> to vector<8x1xf32>
    %79 = vector.broadcast %78 : vector<8x1xf32> to vector<8x256xf32>
    %80 = vector.broadcast %76 : vector<1x256xf32> to vector<8x256xf32>
    %81 = arith.mulf %79, %80 : vector<8x256xf32>
    %82 = arith.addf %63, %81 : vector<8x256xf32>
    %c0_50 = arith.constant 0 : index
    %c0_51 = arith.constant 0 : index
    %83 = vector.load %arg5[%c0_50, %c0_51] : memref<8x1xf32, #tpu.memory_space<vmem>>, vector<8x1xf32>
    %84 = vector.broadcast %83 : vector<8x1xf32> to vector<8x256xf32>
    %85 = arith.addf %82, %84 : vector<8x256xf32>
    %cst_52 = arith.constant 0.000000e+00 : f32
    %86 = vector.broadcast %cst_52 : f32 to vector<8x256xf32>
    %87 = arith.cmpf ogt, %85, %86 : vector<8x256xf32>
    %cst_53 = arith.constant 0.00999999977 : f32
    %88 = vector.broadcast %cst_53 : f32 to vector<8x256xf32>
    %89 = arith.mulf %88, %85 : vector<8x256xf32>
    %90 = arith.select %87, %85, %89 : vector<8x256xi1>, vector<8x256xf32>
    %c0_54 = arith.constant 0 : index
    %c0_55 = arith.constant 0 : index
    %91 = vector.load %arg9[%c0_54, %c0_55] : memref<8x256xf32, #tpu.memory_space<vmem>>, vector<8x256xf32>
    tpu.vector_store %arg9[%c0_54, %c0_55], %90 {strides = array<i32>} : memref<8x256xf32, #tpu.memory_space<vmem>>, vector<8x256xf32>,
    %cst_56 = arith.constant 0.000000e+00 : f32
    %92 = vector.broadcast %cst_56 : f32 to vector<4x256xf32>
    %cst_57 = arith.constant 0.000000e+00 : f32
    %93 = vector.broadcast %cst_57 : f32 to vector<4x256xf32>
    %c0_58 = arith.constant 0 : index
    %c0_59 = arith.constant 0 : index
    %94 = vector.load %arg9[%c0_58, %c0_59] : memref<8x256xf32, #tpu.memory_space<vmem>>, vector<1x256xf32>
    %c32_i32 = arith.constant 32 : i32
    %95 = tpu.dynamic_rotate %94 by %c32_i32 dim 1 : vector<1x256xf32>, i32 -> vector<1x256xf32>
    %c0_60 = arith.constant 0 : index
    %c0_61 = arith.constant 0 : index
    %c0_62 = arith.constant 0 : index
    %c0_63 = arith.constant 0 : index
    %96 = vector.load %arg6[%c0_60, %c0_61, %c0_62, %c0_63] : memref<5x8x4x1xf32, #tpu.memory_space<vmem>>, vector<1x1x4x1xf32>
    %97 = vector.shape_cast %96 : vector<1x1x4x1xf32> to vector<4x1xf32>
    %98 = vector.broadcast %97 : vector<4x1xf32> to vector<4x256xf32>
    %99 = vector.broadcast %95 : vector<1x256xf32> to vector<4x256xf32>
    %100 = arith.mulf %98, %99 : vector<4x256xf32>
    %101 = arith.addf %93, %100 : vector<4x256xf32>
    %c1_64 = arith.constant 1 : index
    %c0_65 = arith.constant 0 : index
    %102 = vector.load %arg9[%c1_64, %c0_65] : memref<8x256xf32, #tpu.memory_space<vmem>>, vector<1x256xf32>
    %c32_i32_66 = arith.constant 32 : i32
    %103 = tpu.dynamic_rotate %102 by %c32_i32_66 dim 1 : vector<1x256xf32>, i32 -> vector<1x256xf32>
    %c0_67 = arith.constant 0 : index
    %c1_68 = arith.constant 1 : index
    %c0_69 = arith.constant 0 : index
    %c0_70 = arith.constant 0 : index
    %104 = vector.load %arg6[%c0_67, %c1_68, %c0_69, %c0_70] : memref<5x8x4x1xf32, #tpu.memory_space<vmem>>, vector<1x1x4x1xf32>
    %105 = vector.shape_cast %104 : vector<1x1x4x1xf32> to vector<4x1xf32>
    %106 = vector.broadcast %105 : vector<4x1xf32> to vector<4x256xf32>
    %107 = vector.broadcast %103 : vector<1x256xf32> to vector<4x256xf32>
    %108 = arith.mulf %106, %107 : vector<4x256xf32>
    %109 = arith.addf %101, %108 : vector<4x256xf32>
    %c2_71 = arith.constant 2 : index
    %c0_72 = arith.constant 0 : index
    %110 = vector.load %arg9[%c2_71, %c0_72] : memref<8x256xf32, #tpu.memory_space<vmem>>, vector<1x256xf32>
    %c32_i32_73 = arith.constant 32 : i32
    %111 = tpu.dynamic_rotate %110 by %c32_i32_73 dim 1 : vector<1x256xf32>, i32 -> vector<1x256xf32>
    %c0_74 = arith.constant 0 : index
    %c2_75 = arith.constant 2 : index
    %c0_76 = arith.constant 0 : index
    %c0_77 = arith.constant 0 : index
    %112 = vector.load %arg6[%c0_74, %c2_75, %c0_76, %c0_77] : memref<5x8x4x1xf32, #tpu.memory_space<vmem>>, vector<1x1x4x1xf32>
    %113 = vector.shape_cast %112 : vector<1x1x4x1xf32> to vector<4x1xf32>
    %114 = vector.broadcast %113 : vector<4x1xf32> to vector<4x256xf32>
    %115 = vector.broadcast %111 : vector<1x256xf32> to vector<4x256xf32>
    %116 = arith.mulf %114, %115 : vector<4x256xf32>
    %117 = arith.addf %109, %116 : vector<4x256xf32>
    %c3_78 = arith.constant 3 : index
    %c0_79 = arith.constant 0 : index
    %118 = vector.load %arg9[%c3_78, %c0_79] : memref<8x256xf32, #tpu.memory_space<vmem>>, vector<1x256xf32>
    %c32_i32_80 = arith.constant 32 : i32
    %119 = tpu.dynamic_rotate %118 by %c32_i32_80 dim 1 : vector<1x256xf32>, i32 -> vector<1x256xf32>
    %c0_81 = arith.constant 0 : index
    %c3_82 = arith.constant 3 : index
    %c0_83 = arith.constant 0 : index
    %c0_84 = arith.constant 0 : index
    %120 = vector.load %arg6[%c0_81, %c3_82, %c0_83, %c0_84] : memref<5x8x4x1xf32, #tpu.memory_space<vmem>>, vector<1x1x4x1xf32>
    %121 = vector.shape_cast %120 : vector<1x1x4x1xf32> to vector<4x1xf32>
    %122 = vector.broadcast %121 : vector<4x1xf32> to vector<4x256xf32>
    %123 = vector.broadcast %119 : vector<1x256xf32> to vector<4x256xf32>
    %124 = arith.mulf %122, %123 : vector<4x256xf32>
    %125 = arith.addf %117, %124 : vector<4x256xf32>
    %c4 = arith.constant 4 : index
    %c0_85 = arith.constant 0 : index
    %126 = vector.load %arg9[%c4, %c0_85] : memref<8x256xf32, #tpu.memory_space<vmem>>, vector<1x256xf32>
    %c32_i32_86 = arith.constant 32 : i32
    %127 = tpu.dynamic_rotate %126 by %c32_i32_86 dim 1 : vector<1x256xf32>, i32 -> vector<1x256xf32>
    %c0_87 = arith.constant 0 : index
    %c4_88 = arith.constant 4 : index
    %c0_89 = arith.constant 0 : index
    %c0_90 = arith.constant 0 : index
    %128 = vector.load %arg6[%c0_87, %c4_88, %c0_89, %c0_90] : memref<5x8x4x1xf32, #tpu.memory_space<vmem>>, vector<1x1x4x1xf32>
    %129 = vector.shape_cast %128 : vector<1x1x4x1xf32> to vector<4x1xf32>
    %130 = vector.broadcast %129 : vector<4x1xf32> to vector<4x256xf32>
    %131 = vector.broadcast %127 : vector<1x256xf32> to vector<4x256xf32>
    %132 = arith.mulf %130, %131 : vector<4x256xf32>
    %133 = arith.addf %125, %132 : vector<4x256xf32>
    %c5 = arith.constant 5 : index
    %c0_91 = arith.constant 0 : index
    %134 = vector.load %arg9[%c5, %c0_91] : memref<8x256xf32, #tpu.memory_space<vmem>>, vector<1x256xf32>
    %c32_i32_92 = arith.constant 32 : i32
    %135 = tpu.dynamic_rotate %134 by %c32_i32_92 dim 1 : vector<1x256xf32>, i32 -> vector<1x256xf32>
    %c0_93 = arith.constant 0 : index
    %c5_94 = arith.constant 5 : index
    %c0_95 = arith.constant 0 : index
    %c0_96 = arith.constant 0 : index
    %136 = vector.load %arg6[%c0_93, %c5_94, %c0_95, %c0_96] : memref<5x8x4x1xf32, #tpu.memory_space<vmem>>, vector<1x1x4x1xf32>
    %137 = vector.shape_cast %136 : vector<1x1x4x1xf32> to vector<4x1xf32>
    %138 = vector.broadcast %137 : vector<4x1xf32> to vector<4x256xf32>
    %139 = vector.broadcast %135 : vector<1x256xf32> to vector<4x256xf32>
    %140 = arith.mulf %138, %139 : vector<4x256xf32>
    %141 = arith.addf %133, %140 : vector<4x256xf32>
    %c6 = arith.constant 6 : index
    %c0_97 = arith.constant 0 : index
    %142 = vector.load %arg9[%c6, %c0_97] : memref<8x256xf32, #tpu.memory_space<vmem>>, vector<1x256xf32>
    %c32_i32_98 = arith.constant 32 : i32
    %143 = tpu.dynamic_rotate %142 by %c32_i32_98 dim 1 : vector<1x256xf32>, i32 -> vector<1x256xf32>
    %c0_99 = arith.constant 0 : index
    %c6_100 = arith.constant 6 : index
    %c0_101 = arith.constant 0 : index
    %c0_102 = arith.constant 0 : index
    %144 = vector.load %arg6[%c0_99, %c6_100, %c0_101, %c0_102] : memref<5x8x4x1xf32, #tpu.memory_space<vmem>>, vector<1x1x4x1xf32>
    %145 = vector.shape_cast %144 : vector<1x1x4x1xf32> to vector<4x1xf32>
    %146 = vector.broadcast %145 : vector<4x1xf32> to vector<4x256xf32>
    %147 = vector.broadcast %143 : vector<1x256xf32> to vector<4x256xf32>
    %148 = arith.mulf %146, %147 : vector<4x256xf32>
    %149 = arith.addf %141, %148 : vector<4x256xf32>
    %c7 = arith.constant 7 : index
    %c0_103 = arith.constant 0 : index
    %150 = vector.load %arg9[%c7, %c0_103] : memref<8x256xf32, #tpu.memory_space<vmem>>, vector<1x256xf32>
    %c32_i32_104 = arith.constant 32 : i32
    %151 = tpu.dynamic_rotate %150 by %c32_i32_104 dim 1 : vector<1x256xf32>, i32 -> vector<1x256xf32>
    %c0_105 = arith.constant 0 : index
    %c7_106 = arith.constant 7 : index
    %c0_107 = arith.constant 0 : index
    %c0_108 = arith.constant 0 : index
    %152 = vector.load %arg6[%c0_105, %c7_106, %c0_107, %c0_108] : memref<5x8x4x1xf32, #tpu.memory_space<vmem>>, vector<1x1x4x1xf32>
    %153 = vector.shape_cast %152 : vector<1x1x4x1xf32> to vector<4x1xf32>
    %154 = vector.broadcast %153 : vector<4x1xf32> to vector<4x256xf32>
    %155 = vector.broadcast %151 : vector<1x256xf32> to vector<4x256xf32>
    %156 = arith.mulf %154, %155 : vector<4x256xf32>
    %157 = arith.addf %149, %156 : vector<4x256xf32>
    %c32_i32_109 = arith.constant 32 : i32
    %158 = vector.broadcast %c32_i32_109 : i32 to vector<1x256xi32>
    %159 = arith.cmpi sge, %0, %158 : vector<1x256xi32>
    %c256_i32 = arith.constant 256 : i32
    %160 = vector.broadcast %c256_i32 : i32 to vector<1x256xi32>
    %161 = arith.cmpi slt, %0, %160 : vector<1x256xi32>
    %162 = arith.andi %159, %161 : vector<1x256xi1>
    %cst_110 = arith.constant 0.000000e+00 : f32
    %163 = vector.shape_cast %162 : vector<1x256xi1> to vector<1x256xi1>
    %164 = vector.broadcast %163 : vector<1x256xi1> to vector<4x256xi1>
    %165 = vector.broadcast %cst_110 : f32 to vector<4x256xf32>
    %166 = arith.select %164, %157, %165 : vector<4x256xi1>, vector<4x256xf32>
    %167 = arith.addf %92, %166 : vector<4x256xf32>
    %cst_111 = arith.constant 0.000000e+00 : f32
    %168 = vector.broadcast %cst_111 : f32 to vector<4x256xf32>
    %c0_112 = arith.constant 0 : index
    %c0_113 = arith.constant 0 : index
    %169 = vector.load %arg9[%c0_112, %c0_113] : memref<8x256xf32, #tpu.memory_space<vmem>>, vector<1x256xf32>
    %c16_i32 = arith.constant 16 : i32
    %170 = tpu.dynamic_rotate %169 by %c16_i32 dim 1 : vector<1x256xf32>, i32 -> vector<1x256xf32>
    %c1_114 = arith.constant 1 : index
    %c0_115 = arith.constant 0 : index
    %c0_116 = arith.constant 0 : index
    %c0_117 = arith.constant 0 : index
    %171 = vector.load %arg6[%c1_114, %c0_115, %c0_116, %c0_117] : memref<5x8x4x1xf32, #tpu.memory_space<vmem>>, vector<1x1x4x1xf32>
    %172 = vector.shape_cast %171 : vector<1x1x4x1xf32> to vector<4x1xf32>
    %173 = vector.broadcast %172 : vector<4x1xf32> to vector<4x256xf32>
    %174 = vector.broadcast %170 : vector<1x256xf32> to vector<4x256xf32>
    %175 = arith.mulf %173, %174 : vector<4x256xf32>
    %176 = arith.addf %168, %175 : vector<4x256xf32>
    %c1_118 = arith.constant 1 : index
    %c0_119 = arith.constant 0 : index
    %177 = vector.load %arg9[%c1_118, %c0_119] : memref<8x256xf32, #tpu.memory_space<vmem>>, vector<1x256xf32>
    %c16_i32_120 = arith.constant 16 : i32
    %178 = tpu.dynamic_rotate %177 by %c16_i32_120 dim 1 : vector<1x256xf32>, i32 -> vector<1x256xf32>
    %c1_121 = arith.constant 1 : index
    %c1_122 = arith.constant 1 : index
    %c0_123 = arith.constant 0 : index
    %c0_124 = arith.constant 0 : index
    %179 = vector.load %arg6[%c1_121, %c1_122, %c0_123, %c0_124] : memref<5x8x4x1xf32, #tpu.memory_space<vmem>>, vector<1x1x4x1xf32>
    %180 = vector.shape_cast %179 : vector<1x1x4x1xf32> to vector<4x1xf32>
    %181 = vector.broadcast %180 : vector<4x1xf32> to vector<4x256xf32>
    %182 = vector.broadcast %178 : vector<1x256xf32> to vector<4x256xf32>
    %183 = arith.mulf %181, %182 : vector<4x256xf32>
    %184 = arith.addf %176, %183 : vector<4x256xf32>
    %c2_125 = arith.constant 2 : index
    %c0_126 = arith.constant 0 : index
    %185 = vector.load %arg9[%c2_125, %c0_126] : memref<8x256xf32, #tpu.memory_space<vmem>>, vector<1x256xf32>
    %c16_i32_127 = arith.constant 16 : i32
    %186 = tpu.dynamic_rotate %185 by %c16_i32_127 dim 1 : vector<1x256xf32>, i32 -> vector<1x256xf32>
    %c1_128 = arith.constant 1 : index
    %c2_129 = arith.constant 2 : index
    %c0_130 = arith.constant 0 : index
    %c0_131 = arith.constant 0 : index
    %187 = vector.load %arg6[%c1_128, %c2_129, %c0_130, %c0_131] : memref<5x8x4x1xf32, #tpu.memory_space<vmem>>, vector<1x1x4x1xf32>
    %188 = vector.shape_cast %187 : vector<1x1x4x1xf32> to vector<4x1xf32>
    %189 = vector.broadcast %188 : vector<4x1xf32> to vector<4x256xf32>
    %190 = vector.broadcast %186 : vector<1x256xf32> to vector<4x256xf32>
    %191 = arith.mulf %189, %190 : vector<4x256xf32>
    %192 = arith.addf %184, %191 : vector<4x256xf32>
    %c3_132 = arith.constant 3 : index
    %c0_133 = arith.constant 0 : index
    %193 = vector.load %arg9[%c3_132, %c0_133] : memref<8x256xf32, #tpu.memory_space<vmem>>, vector<1x256xf32>
    %c16_i32_134 = arith.constant 16 : i32
    %194 = tpu.dynamic_rotate %193 by %c16_i32_134 dim 1 : vector<1x256xf32>, i32 -> vector<1x256xf32>
    %c1_135 = arith.constant 1 : index
    %c3_136 = arith.constant 3 : index
    %c0_137 = arith.constant 0 : index
    %c0_138 = arith.constant 0 : index
    %195 = vector.load %arg6[%c1_135, %c3_136, %c0_137, %c0_138] : memref<5x8x4x1xf32, #tpu.memory_space<vmem>>, vector<1x1x4x1xf32>
    %196 = vector.shape_cast %195 : vector<1x1x4x1xf32> to vector<4x1xf32>
    %197 = vector.broadcast %196 : vector<4x1xf32> to vector<4x256xf32>
    %198 = vector.broadcast %194 : vector<1x256xf32> to vector<4x256xf32>
    %199 = arith.mulf %197, %198 : vector<4x256xf32>
    %200 = arith.addf %192, %199 : vector<4x256xf32>
    %c4_139 = arith.constant 4 : index
    %c0_140 = arith.constant 0 : index
    %201 = vector.load %arg9[%c4_139, %c0_140] : memref<8x256xf32, #tpu.memory_space<vmem>>, vector<1x256xf32>
    %c16_i32_141 = arith.constant 16 : i32
    %202 = tpu.dynamic_rotate %201 by %c16_i32_141 dim 1 : vector<1x256xf32>, i32 -> vector<1x256xf32>
    %c1_142 = arith.constant 1 : index
    %c4_143 = arith.constant 4 : index
    %c0_144 = arith.constant 0 : index
    %c0_145 = arith.constant 0 : index
    %203 = vector.load %arg6[%c1_142, %c4_143, %c0_144, %c0_145] : memref<5x8x4x1xf32, #tpu.memory_space<vmem>>, vector<1x1x4x1xf32>
    %204 = vector.shape_cast %203 : vector<1x1x4x1xf32> to vector<4x1xf32>
    %205 = vector.broadcast %204 : vector<4x1xf32> to vector<4x256xf32>
    %206 = vector.broadcast %202 : vector<1x256xf32> to vector<4x256xf32>
    %207 = arith.mulf %205, %206 : vector<4x256xf32>
    %208 = arith.addf %200, %207 : vector<4x256xf32>
    %c5_146 = arith.constant 5 : index
    %c0_147 = arith.constant 0 : index
    %209 = vector.load %arg9[%c5_146, %c0_147] : memref<8x256xf32, #tpu.memory_space<vmem>>, vector<1x256xf32>
    %c16_i32_148 = arith.constant 16 : i32
    %210 = tpu.dynamic_rotate %209 by %c16_i32_148 dim 1 : vector<1x256xf32>, i32 -> vector<1x256xf32>
    %c1_149 = arith.constant 1 : index
    %c5_150 = arith.constant 5 : index
    %c0_151 = arith.constant 0 : index
    %c0_152 = arith.constant 0 : index
    %211 = vector.load %arg6[%c1_149, %c5_150, %c0_151, %c0_152] : memref<5x8x4x1xf32, #tpu.memory_space<vmem>>, vector<1x1x4x1xf32>
    %212 = vector.shape_cast %211 : vector<1x1x4x1xf32> to vector<4x1xf32>
    %213 = vector.broadcast %212 : vector<4x1xf32> to vector<4x256xf32>
    %214 = vector.broadcast %210 : vector<1x256xf32> to vector<4x256xf32>
    %215 = arith.mulf %213, %214 : vector<4x256xf32>
    %216 = arith.addf %208, %215 : vector<4x256xf32>
    %c6_153 = arith.constant 6 : index
    %c0_154 = arith.constant 0 : index
    %217 = vector.load %arg9[%c6_153, %c0_154] : memref<8x256xf32, #tpu.memory_space<vmem>>, vector<1x256xf32>
    %c16_i32_155 = arith.constant 16 : i32
    %218 = tpu.dynamic_rotate %217 by %c16_i32_155 dim 1 : vector<1x256xf32>, i32 -> vector<1x256xf32>
    %c1_156 = arith.constant 1 : index
    %c6_157 = arith.constant 6 : index
    %c0_158 = arith.constant 0 : index
    %c0_159 = arith.constant 0 : index
    %219 = vector.load %arg6[%c1_156, %c6_157, %c0_158, %c0_159] : memref<5x8x4x1xf32, #tpu.memory_space<vmem>>, vector<1x1x4x1xf32>
    %220 = vector.shape_cast %219 : vector<1x1x4x1xf32> to vector<4x1xf32>
    %221 = vector.broadcast %220 : vector<4x1xf32> to vector<4x256xf32>
    %222 = vector.broadcast %218 : vector<1x256xf32> to vector<4x256xf32>
    %223 = arith.mulf %221, %222 : vector<4x256xf32>
    %224 = arith.addf %216, %223 : vector<4x256xf32>
    %c7_160 = arith.constant 7 : index
    %c0_161 = arith.constant 0 : index
    %225 = vector.load %arg9[%c7_160, %c0_161] : memref<8x256xf32, #tpu.memory_space<vmem>>, vector<1x256xf32>
    %c16_i32_162 = arith.constant 16 : i32
    %226 = tpu.dynamic_rotate %225 by %c16_i32_162 dim 1 : vector<1x256xf32>, i32 -> vector<1x256xf32>
    %c1_163 = arith.constant 1 : index
    %c7_164 = arith.constant 7 : index
    %c0_165 = arith.constant 0 : index
    %c0_166 = arith.constant 0 : index
    %227 = vector.load %arg6[%c1_163, %c7_164, %c0_165, %c0_166] : memref<5x8x4x1xf32, #tpu.memory_space<vmem>>, vector<1x1x4x1xf32>
    %228 = vector.shape_cast %227 : vector<1x1x4x1xf32> to vector<4x1xf32>
    %229 = vector.broadcast %228 : vector<4x1xf32> to vector<4x256xf32>
    %230 = vector.broadcast %226 : vector<1x256xf32> to vector<4x256xf32>
    %231 = arith.mulf %229, %230 : vector<4x256xf32>
    %232 = arith.addf %224, %231 : vector<4x256xf32>
    %c16_i32_167 = arith.constant 16 : i32
    %233 = vector.broadcast %c16_i32_167 : i32 to vector<1x256xi32>
    %234 = arith.cmpi sge, %0, %233 : vector<1x256xi32>
    %c256_i32_168 = arith.constant 256 : i32
    %235 = vector.broadcast %c256_i32_168 : i32 to vector<1x256xi32>
    %236 = arith.cmpi slt, %0, %235 : vector<1x256xi32>
    %237 = arith.andi %234, %236 : vector<1x256xi1>
    %cst_169 = arith.constant 0.000000e+00 : f32
    %238 = vector.shape_cast %237 : vector<1x256xi1> to vector<1x256xi1>
    %239 = vector.broadcast %238 : vector<1x256xi1> to vector<4x256xi1>
    %240 = vector.broadcast %cst_169 : f32 to vector<4x256xf32>
    %241 = arith.select %239, %232, %240 : vector<4x256xi1>, vector<4x256xf32>
    %242 = arith.addf %167, %241 : vector<4x256xf32>
    %cst_170 = arith.constant 0.000000e+00 : f32
    %243 = vector.broadcast %cst_170 : f32 to vector<4x256xf32>
    %c0_171 = arith.constant 0 : index
    %c0_172 = arith.constant 0 : index
    %244 = vector.load %arg9[%c0_171, %c0_172] : memref<8x256xf32, #tpu.memory_space<vmem>>, vector<1x256xf32>
    %c2_173 = arith.constant 2 : index
    %c0_174 = arith.constant 0 : index
    %c0_175 = arith.constant 0 : index
    %c0_176 = arith.constant 0 : index
    %245 = vector.load %arg6[%c2_173, %c0_174, %c0_175, %c0_176] : memref<5x8x4x1xf32, #tpu.memory_space<vmem>>, vector<1x1x4x1xf32>
    %246 = vector.shape_cast %245 : vector<1x1x4x1xf32> to vector<4x1xf32>
    %247 = vector.broadcast %246 : vector<4x1xf32> to vector<4x256xf32>
    %248 = vector.broadcast %244 : vector<1x256xf32> to vector<4x256xf32>
    %249 = arith.mulf %247, %248 : vector<4x256xf32>
    %250 = arith.addf %243, %249 : vector<4x256xf32>
    %c1_177 = arith.constant 1 : index
    %c0_178 = arith.constant 0 : index
    %251 = vector.load %arg9[%c1_177, %c0_178] : memref<8x256xf32, #tpu.memory_space<vmem>>, vector<1x256xf32>
    %c2_179 = arith.constant 2 : index
    %c1_180 = arith.constant 1 : index
    %c0_181 = arith.constant 0 : index
    %c0_182 = arith.constant 0 : index
    %252 = vector.load %arg6[%c2_179, %c1_180, %c0_181, %c0_182] : memref<5x8x4x1xf32, #tpu.memory_space<vmem>>, vector<1x1x4x1xf32>
    %253 = vector.shape_cast %252 : vector<1x1x4x1xf32> to vector<4x1xf32>
    %254 = vector.broadcast %253 : vector<4x1xf32> to vector<4x256xf32>
    %255 = vector.broadcast %251 : vector<1x256xf32> to vector<4x256xf32>
    %256 = arith.mulf %254, %255 : vector<4x256xf32>
    %257 = arith.addf %250, %256 : vector<4x256xf32>
    %c2_183 = arith.constant 2 : index
    %c0_184 = arith.constant 0 : index
    %258 = vector.load %arg9[%c2_183, %c0_184] : memref<8x256xf32, #tpu.memory_space<vmem>>, vector<1x256xf32>
    %c2_185 = arith.constant 2 : index
    %c2_186 = arith.constant 2 : index
    %c0_187 = arith.constant 0 : index
    %c0_188 = arith.constant 0 : index
    %259 = vector.load %arg6[%c2_185, %c2_186, %c0_187, %c0_188] : memref<5x8x4x1xf32, #tpu.memory_space<vmem>>, vector<1x1x4x1xf32>
    %260 = vector.shape_cast %259 : vector<1x1x4x1xf32> to vector<4x1xf32>
    %261 = vector.broadcast %260 : vector<4x1xf32> to vector<4x256xf32>
    %262 = vector.broadcast %258 : vector<1x256xf32> to vector<4x256xf32>
    %263 = arith.mulf %261, %262 : vector<4x256xf32>
    %264 = arith.addf %257, %263 : vector<4x256xf32>
    %c3_189 = arith.constant 3 : index
    %c0_190 = arith.constant 0 : index
    %265 = vector.load %arg9[%c3_189, %c0_190] : memref<8x256xf32, #tpu.memory_space<vmem>>, vector<1x256xf32>
    %c2_191 = arith.constant 2 : index
    %c3_192 = arith.constant 3 : index
    %c0_193 = arith.constant 0 : index
    %c0_194 = arith.constant 0 : index
    %266 = vector.load %arg6[%c2_191, %c3_192, %c0_193, %c0_194] : memref<5x8x4x1xf32, #tpu.memory_space<vmem>>, vector<1x1x4x1xf32>
    %267 = vector.shape_cast %266 : vector<1x1x4x1xf32> to vector<4x1xf32>
    %268 = vector.broadcast %267 : vector<4x1xf32> to vector<4x256xf32>
    %269 = vector.broadcast %265 : vector<1x256xf32> to vector<4x256xf32>
    %270 = arith.mulf %268, %269 : vector<4x256xf32>
    %271 = arith.addf %264, %270 : vector<4x256xf32>
    %c4_195 = arith.constant 4 : index
    %c0_196 = arith.constant 0 : index
    %272 = vector.load %arg9[%c4_195, %c0_196] : memref<8x256xf32, #tpu.memory_space<vmem>>, vector<1x256xf32>
    %c2_197 = arith.constant 2 : index
    %c4_198 = arith.constant 4 : index
    %c0_199 = arith.constant 0 : index
    %c0_200 = arith.constant 0 : index
    %273 = vector.load %arg6[%c2_197, %c4_198, %c0_199, %c0_200] : memref<5x8x4x1xf32, #tpu.memory_space<vmem>>, vector<1x1x4x1xf32>
    %274 = vector.shape_cast %273 : vector<1x1x4x1xf32> to vector<4x1xf32>
    %275 = vector.broadcast %274 : vector<4x1xf32> to vector<4x256xf32>
    %276 = vector.broadcast %272 : vector<1x256xf32> to vector<4x256xf32>
    %277 = arith.mulf %275, %276 : vector<4x256xf32>
    %278 = arith.addf %271, %277 : vector<4x256xf32>
    %c5_201 = arith.constant 5 : index
    %c0_202 = arith.constant 0 : index
    %279 = vector.load %arg9[%c5_201, %c0_202] : memref<8x256xf32, #tpu.memory_space<vmem>>, vector<1x256xf32>
    %c2_203 = arith.constant 2 : index
    %c5_204 = arith.constant 5 : index
    %c0_205 = arith.constant 0 : index
    %c0_206 = arith.constant 0 : index
    %280 = vector.load %arg6[%c2_203, %c5_204, %c0_205, %c0_206] : memref<5x8x4x1xf32, #tpu.memory_space<vmem>>, vector<1x1x4x1xf32>
    %281 = vector.shape_cast %280 : vector<1x1x4x1xf32> to vector<4x1xf32>
    %282 = vector.broadcast %281 : vector<4x1xf32> to vector<4x256xf32>
    %283 = vector.broadcast %279 : vector<1x256xf32> to vector<4x256xf32>
    %284 = arith.mulf %282, %283 : vector<4x256xf32>
    %285 = arith.addf %278, %284 : vector<4x256xf32>
    %c6_207 = arith.constant 6 : index
    %c0_208 = arith.constant 0 : index
    %286 = vector.load %arg9[%c6_207, %c0_208] : memref<8x256xf32, #tpu.memory_space<vmem>>, vector<1x256xf32>
    %c2_209 = arith.constant 2 : index
    %c6_210 = arith.constant 6 : index
    %c0_211 = arith.constant 0 : index
    %c0_212 = arith.constant 0 : index
    %287 = vector.load %arg6[%c2_209, %c6_210, %c0_211, %c0_212] : memref<5x8x4x1xf32, #tpu.memory_space<vmem>>, vector<1x1x4x1xf32>
    %288 = vector.shape_cast %287 : vector<1x1x4x1xf32> to vector<4x1xf32>
    %289 = vector.broadcast %288 : vector<4x1xf32> to vector<4x256xf32>
    %290 = vector.broadcast %286 : vector<1x256xf32> to vector<4x256xf32>
    %291 = arith.mulf %289, %290 : vector<4x256xf32>
    %292 = arith.addf %285, %291 : vector<4x256xf32>
    %c7_213 = arith.constant 7 : index
    %c0_214 = arith.constant 0 : index
    %293 = vector.load %arg9[%c7_213, %c0_214] : memref<8x256xf32, #tpu.memory_space<vmem>>, vector<1x256xf32>
    %c2_215 = arith.constant 2 : index
    %c7_216 = arith.constant 7 : index
    %c0_217 = arith.constant 0 : index
    %c0_218 = arith.constant 0 : index
    %294 = vector.load %arg6[%c2_215, %c7_216, %c0_217, %c0_218] : memref<5x8x4x1xf32, #tpu.memory_space<vmem>>, vector<1x1x4x1xf32>
    %295 = vector.shape_cast %294 : vector<1x1x4x1xf32> to vector<4x1xf32>
    %296 = vector.broadcast %295 : vector<4x1xf32> to vector<4x256xf32>
    %297 = vector.broadcast %293 : vector<1x256xf32> to vector<4x256xf32>
    %298 = arith.mulf %296, %297 : vector<4x256xf32>
    %299 = arith.addf %292, %298 : vector<4x256xf32>
    %300 = arith.addf %242, %299 : vector<4x256xf32>
    %cst_219 = arith.constant 0.000000e+00 : f32
    %301 = vector.broadcast %cst_219 : f32 to vector<4x256xf32>
    %c0_220 = arith.constant 0 : index
    %c0_221 = arith.constant 0 : index
    %302 = vector.load %arg9[%c0_220, %c0_221] : memref<8x256xf32, #tpu.memory_space<vmem>>, vector<1x256xf32>
    %c240_i32 = arith.constant 240 : i32
    %303 = tpu.dynamic_rotate %302 by %c240_i32 dim 1 : vector<1x256xf32>, i32 -> vector<1x256xf32>
    %c3_222 = arith.constant 3 : index
    %c0_223 = arith.constant 0 : index
    %c0_224 = arith.constant 0 : index
    %c0_225 = arith.constant 0 : index
    %304 = vector.load %arg6[%c3_222, %c0_223, %c0_224, %c0_225] : memref<5x8x4x1xf32, #tpu.memory_space<vmem>>, vector<1x1x4x1xf32>
    %305 = vector.shape_cast %304 : vector<1x1x4x1xf32> to vector<4x1xf32>
    %306 = vector.broadcast %305 : vector<4x1xf32> to vector<4x256xf32>
    %307 = vector.broadcast %303 : vector<1x256xf32> to vector<4x256xf32>
    %308 = arith.mulf %306, %307 : vector<4x256xf32>
    %309 = arith.addf %301, %308 : vector<4x256xf32>
    %c1_226 = arith.constant 1 : index
    %c0_227 = arith.constant 0 : index
    %310 = vector.load %arg9[%c1_226, %c0_227] : memref<8x256xf32, #tpu.memory_space<vmem>>, vector<1x256xf32>
    %c240_i32_228 = arith.constant 240 : i32
    %311 = tpu.dynamic_rotate %310 by %c240_i32_228 dim 1 : vector<1x256xf32>, i32 -> vector<1x256xf32>
    %c3_229 = arith.constant 3 : index
    %c1_230 = arith.constant 1 : index
    %c0_231 = arith.constant 0 : index
    %c0_232 = arith.constant 0 : index
    %312 = vector.load %arg6[%c3_229, %c1_230, %c0_231, %c0_232] : memref<5x8x4x1xf32, #tpu.memory_space<vmem>>, vector<1x1x4x1xf32>
    %313 = vector.shape_cast %312 : vector<1x1x4x1xf32> to vector<4x1xf32>
    %314 = vector.broadcast %313 : vector<4x1xf32> to vector<4x256xf32>
    %315 = vector.broadcast %311 : vector<1x256xf32> to vector<4x256xf32>
    %316 = arith.mulf %314, %315 : vector<4x256xf32>
    %317 = arith.addf %309, %316 : vector<4x256xf32>
    %c2_233 = arith.constant 2 : index
    %c0_234 = arith.constant 0 : index
    %318 = vector.load %arg9[%c2_233, %c0_234] : memref<8x256xf32, #tpu.memory_space<vmem>>, vector<1x256xf32>
    %c240_i32_235 = arith.constant 240 : i32
    %319 = tpu.dynamic_rotate %318 by %c240_i32_235 dim 1 : vector<1x256xf32>, i32 -> vector<1x256xf32>
    %c3_236 = arith.constant 3 : index
    %c2_237 = arith.constant 2 : index
    %c0_238 = arith.constant 0 : index
    %c0_239 = arith.constant 0 : index
    %320 = vector.load %arg6[%c3_236, %c2_237, %c0_238, %c0_239] : memref<5x8x4x1xf32, #tpu.memory_space<vmem>>, vector<1x1x4x1xf32>
    %321 = vector.shape_cast %320 : vector<1x1x4x1xf32> to vector<4x1xf32>
    %322 = vector.broadcast %321 : vector<4x1xf32> to vector<4x256xf32>
    %323 = vector.broadcast %319 : vector<1x256xf32> to vector<4x256xf32>
    %324 = arith.mulf %322, %323 : vector<4x256xf32>
    %325 = arith.addf %317, %324 : vector<4x256xf32>
    %c3_240 = arith.constant 3 : index
    %c0_241 = arith.constant 0 : index
    %326 = vector.load %arg9[%c3_240, %c0_241] : memref<8x256xf32, #tpu.memory_space<vmem>>, vector<1x256xf32>
    %c240_i32_242 = arith.constant 240 : i32
    %327 = tpu.dynamic_rotate %326 by %c240_i32_242 dim 1 : vector<1x256xf32>, i32 -> vector<1x256xf32>
    %c3_243 = arith.constant 3 : index
    %c3_244 = arith.constant 3 : index
    %c0_245 = arith.constant 0 : index
    %c0_246 = arith.constant 0 : index
    %328 = vector.load %arg6[%c3_243, %c3_244, %c0_245, %c0_246] : memref<5x8x4x1xf32, #tpu.memory_space<vmem>>, vector<1x1x4x1xf32>
    %329 = vector.shape_cast %328 : vector<1x1x4x1xf32> to vector<4x1xf32>
    %330 = vector.broadcast %329 : vector<4x1xf32> to vector<4x256xf32>
    %331 = vector.broadcast %327 : vector<1x256xf32> to vector<4x256xf32>
    %332 = arith.mulf %330, %331 : vector<4x256xf32>
    %333 = arith.addf %325, %332 : vector<4x256xf32>
    %c4_247 = arith.constant 4 : index
    %c0_248 = arith.constant 0 : index
    %334 = vector.load %arg9[%c4_247, %c0_248] : memref<8x256xf32, #tpu.memory_space<vmem>>, vector<1x256xf32>
    %c240_i32_249 = arith.constant 240 : i32
    %335 = tpu.dynamic_rotate %334 by %c240_i32_249 dim 1 : vector<1x256xf32>, i32 -> vector<1x256xf32>
    %c3_250 = arith.constant 3 : index
    %c4_251 = arith.constant 4 : index
    %c0_252 = arith.constant 0 : index
    %c0_253 = arith.constant 0 : index
    %336 = vector.load %arg6[%c3_250, %c4_251, %c0_252, %c0_253] : memref<5x8x4x1xf32, #tpu.memory_space<vmem>>, vector<1x1x4x1xf32>
    %337 = vector.shape_cast %336 : vector<1x1x4x1xf32> to vector<4x1xf32>
    %338 = vector.broadcast %337 : vector<4x1xf32> to vector<4x256xf32>
    %339 = vector.broadcast %335 : vector<1x256xf32> to vector<4x256xf32>
    %340 = arith.mulf %338, %339 : vector<4x256xf32>
    %341 = arith.addf %333, %340 : vector<4x256xf32>
    %c5_254 = arith.constant 5 : index
    %c0_255 = arith.constant 0 : index
    %342 = vector.load %arg9[%c5_254, %c0_255] : memref<8x256xf32, #tpu.memory_space<vmem>>, vector<1x256xf32>
    %c240_i32_256 = arith.constant 240 : i32
    %343 = tpu.dynamic_rotate %342 by %c240_i32_256 dim 1 : vector<1x256xf32>, i32 -> vector<1x256xf32>
    %c3_257 = arith.constant 3 : index
    %c5_258 = arith.constant 5 : index
    %c0_259 = arith.constant 0 : index
    %c0_260 = arith.constant 0 : index
    %344 = vector.load %arg6[%c3_257, %c5_258, %c0_259, %c0_260] : memref<5x8x4x1xf32, #tpu.memory_space<vmem>>, vector<1x1x4x1xf32>
    %345 = vector.shape_cast %344 : vector<1x1x4x1xf32> to vector<4x1xf32>
    %346 = vector.broadcast %345 : vector<4x1xf32> to vector<4x256xf32>
    %347 = vector.broadcast %343 : vector<1x256xf32> to vector<4x256xf32>
    %348 = arith.mulf %346, %347 : vector<4x256xf32>
    %349 = arith.addf %341, %348 : vector<4x256xf32>
    %c6_261 = arith.constant 6 : index
    %c0_262 = arith.constant 0 : index
    %350 = vector.load %arg9[%c6_261, %c0_262] : memref<8x256xf32, #tpu.memory_space<vmem>>, vector<1x256xf32>
    %c240_i32_263 = arith.constant 240 : i32
    %351 = tpu.dynamic_rotate %350 by %c240_i32_263 dim 1 : vector<1x256xf32>, i32 -> vector<1x256xf32>
    %c3_264 = arith.constant 3 : index
    %c6_265 = arith.constant 6 : index
    %c0_266 = arith.constant 0 : index
    %c0_267 = arith.constant 0 : index
    %352 = vector.load %arg6[%c3_264, %c6_265, %c0_266, %c0_267] : memref<5x8x4x1xf32, #tpu.memory_space<vmem>>, vector<1x1x4x1xf32>
    %353 = vector.shape_cast %352 : vector<1x1x4x1xf32> to vector<4x1xf32>
    %354 = vector.broadcast %353 : vector<4x1xf32> to vector<4x256xf32>
    %355 = vector.broadcast %351 : vector<1x256xf32> to vector<4x256xf32>
    %356 = arith.mulf %354, %355 : vector<4x256xf32>
    %357 = arith.addf %349, %356 : vector<4x256xf32>
    %c7_268 = arith.constant 7 : index
    %c0_269 = arith.constant 0 : index
    %358 = vector.load %arg9[%c7_268, %c0_269] : memref<8x256xf32, #tpu.memory_space<vmem>>, vector<1x256xf32>
    %c240_i32_270 = arith.constant 240 : i32
    %359 = tpu.dynamic_rotate %358 by %c240_i32_270 dim 1 : vector<1x256xf32>, i32 -> vector<1x256xf32>
    %c3_271 = arith.constant 3 : index
    %c7_272 = arith.constant 7 : index
    %c0_273 = arith.constant 0 : index
    %c0_274 = arith.constant 0 : index
    %360 = vector.load %arg6[%c3_271, %c7_272, %c0_273, %c0_274] : memref<5x8x4x1xf32, #tpu.memory_space<vmem>>, vector<1x1x4x1xf32>
    %361 = vector.shape_cast %360 : vector<1x1x4x1xf32> to vector<4x1xf32>
    %362 = vector.broadcast %361 : vector<4x1xf32> to vector<4x256xf32>
    %363 = vector.broadcast %359 : vector<1x256xf32> to vector<4x256xf32>
    %364 = arith.mulf %362, %363 : vector<4x256xf32>
    %365 = arith.addf %357, %364 : vector<4x256xf32>
    %c0_i32 = arith.constant 0 : i32
    %366 = vector.broadcast %c0_i32 : i32 to vector<1x256xi32>
    %367 = arith.cmpi sge, %0, %366 : vector<1x256xi32>
    %c240_i32_275 = arith.constant 240 : i32
    %368 = vector.broadcast %c240_i32_275 : i32 to vector<1x256xi32>
    %369 = arith.cmpi slt, %0, %368 : vector<1x256xi32>
    %370 = arith.andi %367, %369 : vector<1x256xi1>
    %cst_276 = arith.constant 0.000000e+00 : f32
    %371 = vector.shape_cast %370 : vector<1x256xi1> to vector<1x256xi1>
    %372 = vector.broadcast %371 : vector<1x256xi1> to vector<4x256xi1>
    %373 = vector.broadcast %cst_276 : f32 to vector<4x256xf32>
    %374 = arith.select %372, %365, %373 : vector<4x256xi1>, vector<4x256xf32>
    %375 = arith.addf %300, %374 : vector<4x256xf32>
    %cst_277 = arith.constant 0.000000e+00 : f32
    %376 = vector.broadcast %cst_277 : f32 to vector<4x256xf32>
    %c0_278 = arith.constant 0 : index
    %c0_279 = arith.constant 0 : index
    %377 = vector.load %arg9[%c0_278, %c0_279] : memref<8x256xf32, #tpu.memory_space<vmem>>, vector<1x256xf32>
    %c224_i32 = arith.constant 224 : i32
    %378 = tpu.dynamic_rotate %377 by %c224_i32 dim 1 : vector<1x256xf32>, i32 -> vector<1x256xf32>
    %c4_280 = arith.constant 4 : index
    %c0_281 = arith.constant 0 : index
    %c0_282 = arith.constant 0 : index
    %c0_283 = arith.constant 0 : index
    %379 = vector.load %arg6[%c4_280, %c0_281, %c0_282, %c0_283] : memref<5x8x4x1xf32, #tpu.memory_space<vmem>>, vector<1x1x4x1xf32>
    %380 = vector.shape_cast %379 : vector<1x1x4x1xf32> to vector<4x1xf32>
    %381 = vector.broadcast %380 : vector<4x1xf32> to vector<4x256xf32>
    %382 = vector.broadcast %378 : vector<1x256xf32> to vector<4x256xf32>
    %383 = arith.mulf %381, %382 : vector<4x256xf32>
    %384 = arith.addf %376, %383 : vector<4x256xf32>
    %c1_284 = arith.constant 1 : index
    %c0_285 = arith.constant 0 : index
    %385 = vector.load %arg9[%c1_284, %c0_285] : memref<8x256xf32, #tpu.memory_space<vmem>>, vector<1x256xf32>
    %c224_i32_286 = arith.constant 224 : i32
    %386 = tpu.dynamic_rotate %385 by %c224_i32_286 dim 1 : vector<1x256xf32>, i32 -> vector<1x256xf32>
    %c4_287 = arith.constant 4 : index
    %c1_288 = arith.constant 1 : index
    %c0_289 = arith.constant 0 : index
    %c0_290 = arith.constant 0 : index
    %387 = vector.load %arg6[%c4_287, %c1_288, %c0_289, %c0_290] : memref<5x8x4x1xf32, #tpu.memory_space<vmem>>, vector<1x1x4x1xf32>
    %388 = vector.shape_cast %387 : vector<1x1x4x1xf32> to vector<4x1xf32>
    %389 = vector.broadcast %388 : vector<4x1xf32> to vector<4x256xf32>
    %390 = vector.broadcast %386 : vector<1x256xf32> to vector<4x256xf32>
    %391 = arith.mulf %389, %390 : vector<4x256xf32>
    %392 = arith.addf %384, %391 : vector<4x256xf32>
    %c2_291 = arith.constant 2 : index
    %c0_292 = arith.constant 0 : index
    %393 = vector.load %arg9[%c2_291, %c0_292] : memref<8x256xf32, #tpu.memory_space<vmem>>, vector<1x256xf32>
    %c224_i32_293 = arith.constant 224 : i32
    %394 = tpu.dynamic_rotate %393 by %c224_i32_293 dim 1 : vector<1x256xf32>, i32 -> vector<1x256xf32>
    %c4_294 = arith.constant 4 : index
    %c2_295 = arith.constant 2 : index
    %c0_296 = arith.constant 0 : index
    %c0_297 = arith.constant 0 : index
    %395 = vector.load %arg6[%c4_294, %c2_295, %c0_296, %c0_297] : memref<5x8x4x1xf32, #tpu.memory_space<vmem>>, vector<1x1x4x1xf32>
    %396 = vector.shape_cast %395 : vector<1x1x4x1xf32> to vector<4x1xf32>
    %397 = vector.broadcast %396 : vector<4x1xf32> to vector<4x256xf32>
    %398 = vector.broadcast %394 : vector<1x256xf32> to vector<4x256xf32>
    %399 = arith.mulf %397, %398 : vector<4x256xf32>
    %400 = arith.addf %392, %399 : vector<4x256xf32>
    %c3_298 = arith.constant 3 : index
    %c0_299 = arith.constant 0 : index
    %401 = vector.load %arg9[%c3_298, %c0_299] : memref<8x256xf32, #tpu.memory_space<vmem>>, vector<1x256xf32>
    %c224_i32_300 = arith.constant 224 : i32
    %402 = tpu.dynamic_rotate %401 by %c224_i32_300 dim 1 : vector<1x256xf32>, i32 -> vector<1x256xf32>
    %c4_301 = arith.constant 4 : index
    %c3_302 = arith.constant 3 : index
    %c0_303 = arith.constant 0 : index
    %c0_304 = arith.constant 0 : index
    %403 = vector.load %arg6[%c4_301, %c3_302, %c0_303, %c0_304] : memref<5x8x4x1xf32, #tpu.memory_space<vmem>>, vector<1x1x4x1xf32>
    %404 = vector.shape_cast %403 : vector<1x1x4x1xf32> to vector<4x1xf32>
    %405 = vector.broadcast %404 : vector<4x1xf32> to vector<4x256xf32>
    %406 = vector.broadcast %402 : vector<1x256xf32> to vector<4x256xf32>
    %407 = arith.mulf %405, %406 : vector<4x256xf32>
    %408 = arith.addf %400, %407 : vector<4x256xf32>
    %c4_305 = arith.constant 4 : index
    %c0_306 = arith.constant 0 : index
    %409 = vector.load %arg9[%c4_305, %c0_306] : memref<8x256xf32, #tpu.memory_space<vmem>>, vector<1x256xf32>
    %c224_i32_307 = arith.constant 224 : i32
    %410 = tpu.dynamic_rotate %409 by %c224_i32_307 dim 1 : vector<1x256xf32>, i32 -> vector<1x256xf32>
    %c4_308 = arith.constant 4 : index
    %c4_309 = arith.constant 4 : index
    %c0_310 = arith.constant 0 : index
    %c0_311 = arith.constant 0 : index
    %411 = vector.load %arg6[%c4_308, %c4_309, %c0_310, %c0_311] : memref<5x8x4x1xf32, #tpu.memory_space<vmem>>, vector<1x1x4x1xf32>
    %412 = vector.shape_cast %411 : vector<1x1x4x1xf32> to vector<4x1xf32>
    %413 = vector.broadcast %412 : vector<4x1xf32> to vector<4x256xf32>
    %414 = vector.broadcast %410 : vector<1x256xf32> to vector<4x256xf32>
    %415 = arith.mulf %413, %414 : vector<4x256xf32>
    %416 = arith.addf %408, %415 : vector<4x256xf32>
    %c5_312 = arith.constant 5 : index
    %c0_313 = arith.constant 0 : index
    %417 = vector.load %arg9[%c5_312, %c0_313] : memref<8x256xf32, #tpu.memory_space<vmem>>, vector<1x256xf32>
    %c224_i32_314 = arith.constant 224 : i32
    %418 = tpu.dynamic_rotate %417 by %c224_i32_314 dim 1 : vector<1x256xf32>, i32 -> vector<1x256xf32>
    %c4_315 = arith.constant 4 : index
    %c5_316 = arith.constant 5 : index
    %c0_317 = arith.constant 0 : index
    %c0_318 = arith.constant 0 : index
    %419 = vector.load %arg6[%c4_315, %c5_316, %c0_317, %c0_318] : memref<5x8x4x1xf32, #tpu.memory_space<vmem>>, vector<1x1x4x1xf32>
    %420 = vector.shape_cast %419 : vector<1x1x4x1xf32> to vector<4x1xf32>
    %421 = vector.broadcast %420 : vector<4x1xf32> to vector<4x256xf32>
    %422 = vector.broadcast %418 : vector<1x256xf32> to vector<4x256xf32>
    %423 = arith.mulf %421, %422 : vector<4x256xf32>
    %424 = arith.addf %416, %423 : vector<4x256xf32>
    %c6_319 = arith.constant 6 : index
    %c0_320 = arith.constant 0 : index
    %425 = vector.load %arg9[%c6_319, %c0_320] : memref<8x256xf32, #tpu.memory_space<vmem>>, vector<1x256xf32>
    %c224_i32_321 = arith.constant 224 : i32
    %426 = tpu.dynamic_rotate %425 by %c224_i32_321 dim 1 : vector<1x256xf32>, i32 -> vector<1x256xf32>
    %c4_322 = arith.constant 4 : index
    %c6_323 = arith.constant 6 : index
    %c0_324 = arith.constant 0 : index
    %c0_325 = arith.constant 0 : index
    %427 = vector.load %arg6[%c4_322, %c6_323, %c0_324, %c0_325] : memref<5x8x4x1xf32, #tpu.memory_space<vmem>>, vector<1x1x4x1xf32>
    %428 = vector.shape_cast %427 : vector<1x1x4x1xf32> to vector<4x1xf32>
    %429 = vector.broadcast %428 : vector<4x1xf32> to vector<4x256xf32>
    %430 = vector.broadcast %426 : vector<1x256xf32> to vector<4x256xf32>
    %431 = arith.mulf %429, %430 : vector<4x256xf32>
    %432 = arith.addf %424, %431 : vector<4x256xf32>
    %c7_326 = arith.constant 7 : index
    %c0_327 = arith.constant 0 : index
    %433 = vector.load %arg9[%c7_326, %c0_327] : memref<8x256xf32, #tpu.memory_space<vmem>>, vector<1x256xf32>
    %c224_i32_328 = arith.constant 224 : i32
    %434 = tpu.dynamic_rotate %433 by %c224_i32_328 dim 1 : vector<1x256xf32>, i32 -> vector<1x256xf32>
    %c4_329 = arith.constant 4 : index
    %c7_330 = arith.constant 7 : index
    %c0_331 = arith.constant 0 : index
    %c0_332 = arith.constant 0 : index
    %435 = vector.load %arg6[%c4_329, %c7_330, %c0_331, %c0_332] : memref<5x8x4x1xf32, #tpu.memory_space<vmem>>, vector<1x1x4x1xf32>
    %436 = vector.shape_cast %435 : vector<1x1x4x1xf32> to vector<4x1xf32>
    %437 = vector.broadcast %436 : vector<4x1xf32> to vector<4x256xf32>
    %438 = vector.broadcast %434 : vector<1x256xf32> to vector<4x256xf32>
    %439 = arith.mulf %437, %438 : vector<4x256xf32>
    %440 = arith.addf %432, %439 : vector<4x256xf32>
    %c0_i32_333 = arith.constant 0 : i32
    %441 = vector.broadcast %c0_i32_333 : i32 to vector<1x256xi32>
    %442 = arith.cmpi sge, %0, %441 : vector<1x256xi32>
    %c224_i32_334 = arith.constant 224 : i32
    %443 = vector.broadcast %c224_i32_334 : i32 to vector<1x256xi32>
    %444 = arith.cmpi slt, %0, %443 : vector<1x256xi32>
    %445 = arith.andi %442, %444 : vector<1x256xi1>
    %cst_335 = arith.constant 0.000000e+00 : f32
    %446 = vector.shape_cast %445 : vector<1x256xi1> to vector<1x256xi1>
    %447 = vector.broadcast %446 : vector<1x256xi1> to vector<4x256xi1>
    %448 = vector.broadcast %cst_335 : f32 to vector<4x256xf32>
    %449 = arith.select %447, %440, %448 : vector<4x256xi1>, vector<4x256xf32>
    %450 = arith.addf %375, %449 : vector<4x256xf32>
    %c0_336 = arith.constant 0 : index
    %c0_337 = arith.constant 0 : index
    %451 = vector.load %arg7[%c0_336, %c0_337] : memref<4x1xf32, #tpu.memory_space<vmem>>, vector<4x1xf32>
    %452 = vector.broadcast %451 : vector<4x1xf32> to vector<4x256xf32>
    %453 = arith.addf %450, %452 : vector<4x256xf32>
    %c0_338 = arith.constant 0 : index
    %c4_339 = arith.constant 4 : index
    %c0_340 = arith.constant 0 : index
    %454 = vector.load %arg8[%c0_338, %c4_339, %c0_340] : memref<1x8x256xf32, #tpu.memory_space<vmem>>, vector<1x4x256xf32>
    %455 = vector.shape_cast %454 : vector<1x4x256xf32> to vector<4x256xf32>
    %456 = vector.shape_cast %453 : vector<4x256xf32> to vector<1x4x256xf32>
    tpu.vector_store %arg8[%c0_338, %c4_339, %c0_340], %456 {strides = array<i32>} : memref<1x8x256xf32, #tpu.memory_space<vmem>>, vector<1x4x256xf32>,
    return
  }
  func.func @transform_0(%arg0: i32) -> (i32, i32, i32) {
    %c0_i32 = arith.constant 0 : i32
    %c0_i32_0 = arith.constant 0 : i32
    %c0_i32_1 = arith.constant 0 : i32
    return %arg0, %c0_i32, %c0_i32_0 : i32, i32, i32
  }
  func.func @transform_1(%arg0: i32) -> (i32, i32) {
    %c0_i32 = arith.constant 0 : i32
    %c0_i32_0 = arith.constant 0 : i32
    %c0_i32_1 = arith.constant 0 : i32
    return %c0_i32, %c0_i32_0 : i32, i32
  }
  func.func @transform_2(%arg0: i32) -> (i32, i32) {
    %c0_i32 = arith.constant 0 : i32
    %c0_i32_0 = arith.constant 0 : i32
    %c0_i32_1 = arith.constant 0 : i32
    return %c0_i32, %c0_i32_0 : i32, i32
  }
  func.func @transform_3(%arg0: i32) -> (i32, i32, i32) {
    %c0_i32 = arith.constant 0 : i32
    %c0_i32_0 = arith.constant 0 : i32
    %c0_i32_1 = arith.constant 0 : i32
    %c0_i32_2 = arith.constant 0 : i32
    return %c0_i32, %c0_i32_0, %c0_i32_1 : i32, i32, i32
  }
  func.func @transform_4(%arg0: i32) -> (i32, i32) {
    %c0_i32 = arith.constant 0 : i32
    %c0_i32_0 = arith.constant 0 : i32
    %c0_i32_1 = arith.constant 0 : i32
    return %c0_i32, %c0_i32_0 : i32, i32
  }
  func.func @transform_5(%arg0: i32) -> (i32, i32, i32, i32) {
    %c0_i32 = arith.constant 0 : i32
    %c0_i32_0 = arith.constant 0 : i32
    %c0_i32_1 = arith.constant 0 : i32
    %c0_i32_2 = arith.constant 0 : i32
    %c0_i32_3 = arith.constant 0 : i32
    return %c0_i32, %c0_i32_0, %c0_i32_1, %c0_i32_2 : i32, i32, i32, i32
  }
  func.func @transform_6(%arg0: i32) -> (i32, i32) {
    %c0_i32 = arith.constant 0 : i32
    %c0_i32_0 = arith.constant 0 : i32
    %c0_i32_1 = arith.constant 0 : i32
    return %c0_i32, %c0_i32_0 : i32, i32
  }
  func.func @transform_7(%arg0: i32) -> (i32, i32, i32) {
    %c0_i32 = arith.constant 0 : i32
    %c0_i32_0 = arith.constant 0 : i32
    %c0_i32_1 = arith.constant 0 : i32
    return %arg0, %c0_i32, %c0_i32_0 : i32, i32, i32
  }
}

</mosaic_0001>

<llo_original>
// kernel: dense_filter_forward.1
$region0: #{dense_filter_forward.1}
  #allocation0 [shape = 'u32[]', space=smem, size = 0x4, offset = 0x4, fixed_abs, tag = 'smem constant byte address 0x4 - core index']
  #allocation1 [shape = 'u32[144,128]{1,0:T(1,128)}', space=vmem, size = 0x12000, scoped, tag = 'internal scratch']
  #allocation2 [shape = 'f32[8,256]{1,0:T(8,128)}', space=vmem, size = 0x2000, scoped, tag = 'scratch operand']
  %s0 = inlined_call_operand.vmem [shape: f32[2,4,256], index: 0, kind: input, shape index: {}]
  %s1 = inlined_call_operand.vmem [shape: f32[4,1], index: 1, kind: input, shape index: {}]
  %s2 = inlined_call_operand.vmem [shape: f32[4,1], index: 2, kind: input, shape index: {}]
  %s3 = inlined_call_operand.vmem [shape: f32[4,8,1], index: 3, kind: input, shape index: {}]
  %s4 = inlined_call_operand.vmem [shape: f32[8,1], index: 4, kind: input, shape index: {}]
  %s5 = inlined_call_operand.hbm [shape: f32[5,8,4,1], index: 5, kind: input, shape index: {}]
  %s6 = inlined_call_operand.vmem [shape: f32[4,1], index: 6, kind: input, shape index: {}]
  %s7 = inlined_call_operand.vmem [shape: f32[2,8,256], index: 7, kind: output, shape index: {}]
  %s8 = sld [smem:[#allocation0]]
  $region65: #{dense_filter_forward.1} parent=0
    _
  %s10 = ssub.s32 1, %s8
  %s11 = scalar_select 0, %s10, %s8
  $region1: #{dense_filter_forward.1} parent=0
    #allocation3 [shape = 'u8[81920]{0}', space=vmem, size = 0x14000, scoped, tag = 'input window, operand 5, single buffered']
    #allocation4 [shape = 's32[2]{0}', space=sflag, size = 0x8, scoped, tag = 'scoped memory for dense_filter_forward.1']
    %12 = vsyncpa [#allocation4], 0
    loop: start=0, step=1, limit=4
    $region2: #{dense_filter_forward.1} parent=1 // loop_pre_header
      _
    $region3: #{dense_filter_forward.1} parent=1 // loop_header
      %s14 = sphi 0, %s18
      %p15 = scmp.ge.s32.totalorder %s14, 4
      %s24 = sphi 0, %s26
      %s27 = sphi 0, %s24
      %s28 = sphi 0, %s27
      %s44 = sphi 0, %s28
      %s48 = sphi 0, %s48
      %s50 = sphi 0, %s48
      %s51 = sphi 0, %s50
      %s65 = sphi 0, %s51
      %s69 = sphi 0, %s69
      %s71 = sphi 0, %s69
      %s72 = sphi 0, %s71
      %s86 = sphi 0, %s72
      %s90 = sphi 0, %s90
      %s92 = sphi 0, %s90
      %s93 = sphi 0, %s92
      %s107 = sphi 0, %s93
      %s111 = sphi 0, %s111
      %s113 = sphi 0, %s111
      %s114 = sphi 0, %s113
      %s128 = sphi 0, %s114
      %s132 = sphi 0, %s132
      %s134 = sphi 0, %s132
      %s135 = sphi 0, %s134
      %s149 = sphi 0, %s135
      %s153 = sphi 0, %s153
      %s155 = sphi 0, %s153
      %s156 = sphi 0, %s155
      %s170 = sphi 0, %s156
      %s176 = sphi 0, %s178
      %s179 = sphi 0, %s176
      %s180 = sphi 0, %s179
      %s196 = sphi 0, %s180
    $region4: #{dense_filter_forward.1} parent=1 // loop_header_branch
      %17 = sbr.rel (%p15) target = $region8
    $region5: #{dense_filter_forward.1} parent=1 // loop_body
      %s19 = ssub.s32 %s14, 1
      %s20 = ssub.s32 %s14, 2
      %s21 = sadd.s32 %s14, 1
      %s22 = ssub.s32 %s14, %s21
      %p23 = scmp.eq.s32.totalorder %s22, 0
      %s25 = sadd.s32 %s24, 1
      %s26 = scalar_select %p23, %s24, %s25
      %p29 = pneg %p23
      %p30 = scmp.eq.s32.totalorder %s14, 1
      %p31 = por %p29, %p30
      %p32 = scmp.ne.s32.totalorder %s24, %s27
      %p33 = scmp.eq.s32.totalorder %s14, 0
      %p34 = por %p32, %p33
      %p35 = scmp.ne.s32.totalorder %s24, %s27
      %p36 = scmp.eq.s32.totalorder %s19, 1
      %p37 = por %p35, %p36
      %p38 = scmp.ne.s32.totalorder %s27, %s28
      %p39 = scmp.eq.s32.totalorder %s19, 0
      %p40 = por %p38, %p39
      %p41 = scmp.ne.s32.totalorder %s27, %s28
      %p42 = scmp.eq.s32.totalorder %s20, 1
      %p43 = por %p41, %p42
      %p45 = scmp.ne.s32.totalorder %s28, %s44
      %p46 = scmp.eq.s32.totalorder %s20, 0
      %p47 = por %p45, %p46
      %s49 = sadd.s32 %s48, 1
      %p52 = scmp.eq.s32.totalorder %s14, 1
      %p53 = scmp.ne.s32.totalorder %s48, %s50
      %p54 = scmp.eq.s32.totalorder %s14, 0
      %p55 = por %p53, %p54
      %p56 = scmp.ne.s32.totalorder %s48, %s50
      %p57 = scmp.eq.s32.totalorder %s19, 1
      %p58 = por %p56, %p57
      %p59 = scmp.ne.s32.totalorder %s50, %s51
      %p60 = scmp.eq.s32.totalorder %s19, 0
      %p61 = por %p59, %p60
      %p62 = scmp.ne.s32.totalorder %s50, %s51
      %p63 = scmp.eq.s32.totalorder %s20, 1
      %p64 = por %p62, %p63
      %p66 = scmp.ne.s32.totalorder %s51, %s65
      %p67 = scmp.eq.s32.totalorder %s20, 0
      %p68 = por %p66, %p67
      %s70 = sadd.s32 %s69, 1
      %p73 = scmp.eq.s32.totalorder %s14, 1
      %p74 = scmp.ne.s32.totalorder %s69, %s71
      %p75 = scmp.eq.s32.totalorder %s14, 0
      %p76 = por %p74, %p75
      %p77 = scmp.ne.s32.totalorder %s69, %s71
      %p78 = scmp.eq.s32.totalorder %s19, 1
      %p79 = por %p77, %p78
      %p80 = scmp.ne.s32.totalorder %s71, %s72
      %p81 = scmp.eq.s32.totalorder %s19, 0
      %p82 = por %p80, %p81
      %p83 = scmp.ne.s32.totalorder %s71, %s72
      %p84 = scmp.eq.s32.totalorder %s20, 1
      %p85 = por %p83, %p84
      %p87 = scmp.ne.s32.totalorder %s72, %s86
      %p88 = scmp.eq.s32.totalorder %s20, 0
      %p89 = por %p87, %p88
      %s91 = sadd.s32 %s90, 1
      %p94 = scmp.eq.s32.totalorder %s14, 1
      %p95 = scmp.ne.s32.totalorder %s90, %s92
      %p96 = scmp.eq.s32.totalorder %s14, 0
      %p97 = por %p95, %p96
      %p98 = scmp.ne.s32.totalorder %s90, %s92
      %p99 = scmp.eq.s32.totalorder %s19, 1
      %p100 = por %p98, %p99
      %p101 = scmp.ne.s32.totalorder %s92, %s93
      %p102 = scmp.eq.s32.totalorder %s19, 0
      %p103 = por %p101, %p102
      %p104 = scmp.ne.s32.totalorder %s92, %s93
      %p105 = scmp.eq.s32.totalorder %s20, 1
      %p106 = por %p104, %p105
      %p108 = scmp.ne.s32.totalorder %s93, %s107
      %p109 = scmp.eq.s32.totalorder %s20, 0
      %p110 = por %p108, %p109
      %s112 = sadd.s32 %s111, 1
      %p115 = scmp.eq.s32.totalorder %s14, 1
      %p116 = scmp.ne.s32.totalorder %s111, %s113
      %p117 = scmp.eq.s32.totalorder %s14, 0
      %p118 = por %p116, %p117
      %p119 = scmp.ne.s32.totalorder %s111, %s113
      %p120 = scmp.eq.s32.totalorder %s19, 1
      %p121 = por %p119, %p120
      %p122 = scmp.ne.s32.totalorder %s113, %s114
      %p123 = scmp.eq.s32.totalorder %s19, 0
      %p124 = por %p122, %p123
      %p125 = scmp.ne.s32.totalorder %s113, %s114
      %p126 = scmp.eq.s32.totalorder %s20, 1
      %p127 = por %p125, %p126
      %p129 = scmp.ne.s32.totalorder %s114, %s128
      %p130 = scmp.eq.s32.totalorder %s20, 0
      %p131 = por %p129, %p130
      %s133 = sadd.s32 %s132, 1
      %p136 = scmp.eq.s32.totalorder %s14, 1
      %p137 = scmp.ne.s32.totalorder %s132, %s134
      %p138 = scmp.eq.s32.totalorder %s14, 0
      %p139 = por %p137, %p138
      %p140 = scmp.ne.s32.totalorder %s132, %s134
      %p141 = scmp.eq.s32.totalorder %s19, 1
      %p142 = por %p140, %p141
      %p143 = scmp.ne.s32.totalorder %s134, %s135
      %p144 = scmp.eq.s32.totalorder %s19, 0
      %p145 = por %p143, %p144
      %p146 = scmp.ne.s32.totalorder %s134, %s135
      %p147 = scmp.eq.s32.totalorder %s20, 1
      %p148 = por %p146, %p147
      %p150 = scmp.ne.s32.totalorder %s135, %s149
      %p151 = scmp.eq.s32.totalorder %s20, 0
      %p152 = por %p150, %p151
      %s154 = sadd.s32 %s153, 1
      %p157 = scmp.eq.s32.totalorder %s14, 1
      %p158 = scmp.ne.s32.totalorder %s153, %s155
      %p159 = scmp.eq.s32.totalorder %s14, 0
      %p160 = por %p158, %p159
      %p161 = scmp.ne.s32.totalorder %s153, %s155
      %p162 = scmp.eq.s32.totalorder %s19, 1
      %p163 = por %p161, %p162
      %p164 = scmp.ne.s32.totalorder %s155, %s156
      %p165 = scmp.eq.s32.totalorder %s19, 0
      %p166 = por %p164, %p165
      %p167 = scmp.ne.s32.totalorder %s155, %s156
      %p168 = scmp.eq.s32.totalorder %s20, 1
      %p169 = por %p167, %p168
      %p171 = scmp.ne.s32.totalorder %s156, %s170
      %p172 = scmp.eq.s32.totalorder %s20, 0
      %p173 = por %p171, %p172
      %s174 = ssub.s32 %s14, %s21
      %p175 = scmp.eq.s32.totalorder %s174, 0
      %s177 = sadd.s32 %s176, 1
      %s178 = scalar_select %p175, %s176, %s177
      %p181 = pneg %p175
      %p182 = scmp.eq.s32.totalorder %s14, 1
      %p183 = por %p181, %p182
      %p184 = scmp.ne.s32.totalorder %s176, %s179
      %p185 = scmp.eq.s32.totalorder %s14, 0
      %p186 = por %p184, %p185
      %p187 = scmp.ne.s32.totalorder %s176, %s179
      %p188 = scmp.eq.s32.totalorder %s19, 1
      %p189 = por %p187, %p188
      %p190 = scmp.ne.s32.totalorder %s179, %s180
      %p191 = scmp.eq.s32.totalorder %s19, 0
      %p192 = por %p190, %p191
      %p193 = scmp.ne.s32.totalorder %s179, %s180
      %p194 = scmp.eq.s32.totalorder %s20, 1
      %p195 = por %p193, %p194
      %p197 = scmp.ne.s32.totalorder %s180, %s196
      %p198 = scmp.eq.s32.totalorder %s20, 0
      %p199 = por %p197, %p198
      %p200 = scmp.le.s32.totalorder 1, %s14
      %p201 = scmp.lt.s32.totalorder %s14, 3
      %p202 = pnand %p200, %p201
      %p203 = pneg %p202
      // Predicated region
      $region9: #{dense_filter_forward.1} parent=5 // pred_check
        _
      $region10: #{dense_filter_forward.1} parent=5 // pred_check_branch
        %205 = sbr.rel (%p202) target = $region12
      $region11: #{dense_filter_forward.1} parent=5 // pred_region
        %s206 = ssub.s32 %s14, 1
        // Predicated region
        $region13: #{dense_filter_forward.1} parent=11 // pred_check
          %p207 = pneg %p61
        $region14: #{dense_filter_forward.1} parent=11 // pred_check_branch
          %209 = sbr.rel (%p207) target = $region16
        $region15: #{dense_filter_forward.1} parent=11 // pred_region
          _
        $region16: #{dense_filter_forward.1} parent=11 // pred_fallthru
          _
        // Predicated region
        $region17: #{dense_filter_forward.1} parent=11 // pred_check
          %p210 = pneg %p82
        $region18: #{dense_filter_forward.1} parent=11 // pred_check_branch
          %212 = sbr.rel (%p210) target = $region20
        $region19: #{dense_filter_forward.1} parent=11 // pred_region
          _
        $region20: #{dense_filter_forward.1} parent=11 // pred_fallthru
          _
        // Predicated region
        $region21: #{dense_filter_forward.1} parent=11 // pred_check
          %p213 = pneg %p103
        $region22: #{dense_filter_forward.1} parent=11 // pred_check_branch
          %215 = sbr.rel (%p213) target = $region24
        $region23: #{dense_filter_forward.1} parent=11 // pred_region
          _
        $region24: #{dense_filter_forward.1} parent=11 // pred_fallthru
          _
        // Predicated region
        $region25: #{dense_filter_forward.1} parent=11 // pred_check
          %p216 = pneg %p124
        $region26: #{dense_filter_forward.1} parent=11 // pred_check_branch
          %218 = sbr.rel (%p216) target = $region28
        $region27: #{dense_filter_forward.1} parent=11 // pred_region
          _
        $region28: #{dense_filter_forward.1} parent=11 // pred_fallthru
          _
        // Predicated region
        $region29: #{dense_filter_forward.1} parent=11 // pred_check
          %p219 = pneg %p145
        $region30: #{dense_filter_forward.1} parent=11 // pred_check_branch
          %221 = sbr.rel (%p219) target = $region32
        $region31: #{dense_filter_forward.1} parent=11 // pred_region
          %s223 = ssub.s32 2560, 2560
          %224 = vsyncadd [#allocation4], %s223
          %s225 = sshll.u32 [#allocation3], 4
          %s226 = int_to_ptr.vmem [resolvable:$true] %s225
          %231 = dma.hbm_to_vmem [thread:$0]  %s5, 2560, %s226, [#allocation4], 64, 64, 4
        $region32: #{dense_filter_forward.1} parent=11 // pred_fallthru
          _
        // Predicated region
        $region33: #{dense_filter_forward.1} parent=11 // pred_check
          %p232 = pneg %p166
        $region34: #{dense_filter_forward.1} parent=11 // pred_check_branch
          %234 = sbr.rel (%p232) target = $region36
        $region35: #{dense_filter_forward.1} parent=11 // pred_region
          _
        $region36: #{dense_filter_forward.1} parent=11 // pred_fallthru
          _
      $region12: #{dense_filter_forward.1} parent=5 // pred_fallthru
        _
      %p235 = scmp.lt.s32.totalorder %s14, 2
      // Predicated region
      $region37: #{dense_filter_forward.1} parent=5 // pred_check
        %p236 = pneg %p235
      $region38: #{dense_filter_forward.1} parent=5 // pred_check_branch
        %238 = sbr.rel (%p236) target = $region40
      $region39: #{dense_filter_forward.1} parent=5 // pred_region
        // Predicated region
        $region41: #{dense_filter_forward.1} parent=39 // pred_check
          %p239 = pneg %p34
        $region42: #{dense_filter_forward.1} parent=39 // pred_check_branch
          %241 = sbr.rel (%p239) target = $region44
        $region43: #{dense_filter_forward.1} parent=39 // pred_region
          %p242 = scmp.lt.s32.totalorder %s14, 1
          %s243 = scalar_select %p242, %s14, 1
          %s244 = smul.addr %s243, 2
          %s245 = smul.addr %s244, 4
          %s246 = scalar_lea.vmem %s0, %s245
        $region44: #{dense_filter_forward.1} parent=39 // pred_fallthru
          _
      $region40: #{dense_filter_forward.1} parent=5 // pred_fallthru
        _
      %p247 = scmp.le.s32.totalorder 1, %s14
      %p248 = scmp.lt.s32.totalorder %s14, 3
      %p249 = pnand %p247, %p248
      %p250 = pneg %p249
      // Predicated region
      $region45: #{dense_filter_forward.1} parent=5 // pred_check
        _
      $region46: #{dense_filter_forward.1} parent=5 // pred_check_branch
        %252 = sbr.rel (%p249) target = $region48
      $region47: #{dense_filter_forward.1} parent=5 // pred_region
        %s253 = ssub.s32 %s14, 1
        // Predicated region
        $region49: #{dense_filter_forward.1} parent=47 // pred_check
          %p254 = pneg %p145
        $region50: #{dense_filter_forward.1} parent=47 // pred_check_branch
          %256 = sbr.rel (%p254) target = $region52
        $region51: #{dense_filter_forward.1} parent=47 // pred_region
          %257 = dma.done [#allocation4], 2560
        $region52: #{dense_filter_forward.1} parent=47 // pred_fallthru
          _
        %p258 = scmp.lt.s32.totalorder %s19, 1
        %s259 = scalar_select %p258, %s19, 1
        %s260 = smul.addr %s259, 2
        %s261 = smul.addr %s260, 4
        %s262 = scalar_lea.vmem %s0, %s261
        %p263 = pneg %p40
        %p264 = pneg %p37
        %p265 = pneg %p61
        %p266 = pneg %p58
        %p267 = pneg %p82
        %p268 = pneg %p79
        %p269 = pneg %p103
        %p270 = pneg %p100
        %p271 = pneg %p124
        %p272 = pneg %p121
        %p273 = pneg %p145
        %p274 = pneg %p142
        %p275 = pneg %p166
        %p276 = pneg %p163
        %p277 = pneg %p192
        %p278 = pneg %p189
        %p279 = scmp.lt.s32.totalorder %s19, 1
        %s280 = scalar_select %p279, %s19, 1
        %s281 = smul.addr %s280, 2
        %s282 = smul.addr %s281, 8
        %s283 = scalar_lea.vmem %s7, %s282
        %p284 = scmp.lt.s32.totalorder %s19, 1
        %s285 = scalar_select %p284, %s19, 1
        %s286 = smul.addr %s285, 2
        %s287 = smul.addr %s286, 4
        %s288 = scalar_lea.vmem %s0, %s287
        %p289 = scmp.lt.s32.totalorder %s19, 1
        %s290 = scalar_select %p289, %s19, 1
        %s291 = smul.addr %s290, 2
        %s292 = smul.addr %s291, 8
        %s293 = scalar_lea.vmem %s7, %s292
        %v294 = vlaneseq
        %v295 = vand.u32 %v294, 127
        %v296 = vadd.s32 %v295, 128
        %v297 = vld [vmem:[%s288] sm:$0xff]
        %v299 = vcombine.high %v297, %v297
        %301 = vst [vmem:[%s293] sm:$0xf] %v297
        %302 = vst [vmem:[%s293 + $0x8] sm:$0xf] %v299
        %v303 = vld [vmem:[%s288] ss:$4 sm:$0x3]
        %v304 = vld [vmem:[%s1] sm:$0x1]
        %306 = vset.pattern.permute.xlu0 0
        %307 = vperm.xlu0 %306, %v304
        %v308 = vpop.permute.xlu0 %307
        %v309 = vlaneseq
        %v310 = vshrl.u32 %v309, 7
        %v311 = vsub.s32 0, %v310
        %v312 = vrot.slane %v308, %v311
        %v314 = vmul.f32 %v303, %v312
        %v315 = vld [vmem:[%s2] sm:$0x1]
        %317 = vset.pattern.permute.xlu0 0
        %318 = vperm.xlu0 %317, %v315
        %v319 = vpop.permute.xlu0 %318
        %v320 = vlaneseq
        %v321 = vshrl.u32 %v320, 7
        %v322 = vsub.s32 0, %v321
        %v323 = vrot.slane %v319, %v322
        %v325 = vadd.f32 %v314, %v323
        %vm326 = vcmp.gt.f32.partialorder %v325, 0.0
        %v327 = vmul.f32 %v325, 0.01
        %v328 = vsel %vm326, %v325, %v327
        %v329 = vld [vmem:[%s3] sm:$0xff]
        %331 = vset.pattern.permute.xlu0 0
        %332 = vperm.xlu0 %331, %v329
        %v333 = vpop.permute.xlu0 %332
        %v336 = vlaneseq
        %v337 = vshrl.u32 %v336, 7
        %v338 = vsub.s32 0, %v337
        %v339 = vrot.slane %v328, %v338
        %v340 = vlaneseq
        %v341 = vshrl.u32 %v340, 7
        %v342 = vsub.s32 1, %v341
        %v343 = vrot.slane %v328, %v342
        %v346 = vmul.f32 %v333, %v339
        %v347 = vmul.f32 %v333, %v343
        %v348 = vadd.f32 %v346, 0.0
        %v349 = vadd.f32 %v347, 0.0
        %s350 = scalar_lea.vmem %s288, 1
        %v351 = vld [vmem:[%s350] ss:$4 sm:$0x3]
        %v352 = vld [vmem:[%s1 + $0x1] sm:$0x1]
        %354 = vset.pattern.permute.xlu0 0
        %355 = vperm.xlu0 %354, %v352
        %v356 = vpop.permute.xlu0 %355
        %v357 = vlaneseq
        %v358 = vshrl.u32 %v357, 7
        %v359 = vsub.s32 0, %v358
        %v360 = vrot.slane %v356, %v359
        %v362 = vmul.f32 %v351, %v360
        %v363 = vld [vmem:[%s2 + $0x1] sm:$0x1]
        %365 = vset.pattern.permute.xlu0 0
        %366 = vperm.xlu0 %365, %v363
        %v367 = vpop.permute.xlu0 %366
        %v368 = vlaneseq
        %v369 = vshrl.u32 %v368, 7
        %v370 = vsub.s32 0, %v369
        %v371 = vrot.slane %v367, %v370
        %v373 = vadd.f32 %v362, %v371
        %vm374 = vcmp.gt.f32.partialorder %v373, 0.0
        %v375 = vmul.f32 %v373, 0.01
        %v376 = vsel %vm374, %v373, %v375
        %s377 = scalar_lea.vmem %s3, 8
        %v378 = vld [vmem:[%s377] sm:$0xff]
        %380 = vset.pattern.permute.xlu0 0
        %381 = vperm.xlu0 %380, %v378
        %v382 = vpop.permute.xlu0 %381
        %v385 = vlaneseq
        %v386 = vshrl.u32 %v385, 7
        %v387 = vsub.s32 0, %v386
        %v388 = vrot.slane %v376, %v387
        %v389 = vlaneseq
        %v390 = vshrl.u32 %v389, 7
        %v391 = vsub.s32 1, %v390
        %v392 = vrot.slane %v376, %v391
        %v395 = vmul.f32 %v382, %v388
        %v396 = vmul.f32 %v382, %v392
        %v397 = vadd.f32 %v348, %v395
        %v398 = vadd.f32 %v349, %v396
        %s399 = scalar_lea.vmem %s288, 2
        %v400 = vld [vmem:[%s399] ss:$4 sm:$0x3]
        %v401 = vld [vmem:[%s1 + $0x2] sm:$0x1]
        %403 = vset.pattern.permute.xlu0 0
        %404 = vperm.xlu0 %403, %v401
        %v405 = vpop.permute.xlu0 %404
        %v406 = vlaneseq
        %v407 = vshrl.u32 %v406, 7
        %v408 = vsub.s32 0, %v407
        %v409 = vrot.slane %v405, %v408
        %v411 = vmul.f32 %v400, %v409
        %v412 = vld [vmem:[%s2 + $0x2] sm:$0x1]
        %414 = vset.pattern.permute.xlu0 0
        %415 = vperm.xlu0 %414, %v412
        %v416 = vpop.permute.xlu0 %415
        %v417 = vlaneseq
        %v418 = vshrl.u32 %v417, 7
        %v419 = vsub.s32 0, %v418
        %v420 = vrot.slane %v416, %v419
        %v422 = vadd.f32 %v411, %v420
        %vm423 = vcmp.gt.f32.partialorder %v422, 0.0
        %v424 = vmul.f32 %v422, 0.01
        %v425 = vsel %vm423, %v422, %v424
        %s426 = scalar_lea.vmem %s3, 16
        %v427 = vld [vmem:[%s426] sm:$0xff]
        %429 = vset.pattern.permute.xlu0 0
        %430 = vperm.xlu0 %429, %v427
        %v431 = vpop.permute.xlu0 %430
        %v434 = vlaneseq
        %v435 = vshrl.u32 %v434, 7
        %v436 = vsub.s32 0, %v435
        %v437 = vrot.slane %v425, %v436
        %v438 = vlaneseq
        %v439 = vshrl.u32 %v438, 7
        %v440 = vsub.s32 1, %v439
        %v441 = vrot.slane %v425, %v440
        %v444 = vmul.f32 %v431, %v437
        %v445 = vmul.f32 %v431, %v441
        %v446 = vadd.f32 %v397, %v444
        %v447 = vadd.f32 %v398, %v445
        %s448 = scalar_lea.vmem %s288, 3
        %v449 = vld [vmem:[%s448] ss:$4 sm:$0x3]
        %v450 = vld [vmem:[%s1 + $0x3] sm:$0x1]
        %452 = vset.pattern.permute.xlu0 0
        %453 = vperm.xlu0 %452, %v450
        %v454 = vpop.permute.xlu0 %453
        %v455 = vlaneseq
        %v456 = vshrl.u32 %v455, 7
        %v457 = vsub.s32 0, %v456
        %v458 = vrot.slane %v454, %v457
        %v460 = vmul.f32 %v449, %v458
        %v461 = vld [vmem:[%s2 + $0x3] sm:$0x1]
        %463 = vset.pattern.permute.xlu0 0
        %464 = vperm.xlu0 %463, %v461
        %v465 = vpop.permute.xlu0 %464
        %v466 = vlaneseq
        %v467 = vshrl.u32 %v466, 7
        %v468 = vsub.s32 0, %v467
        %v469 = vrot.slane %v465, %v468
        %v471 = vadd.f32 %v460, %v469
        %vm472 = vcmp.gt.f32.partialorder %v471, 0.0
        %v473 = vmul.f32 %v471, 0.01
        %v474 = vsel %vm472, %v471, %v473
        %s475 = scalar_lea.vmem %s3, 24
        %v476 = vld [vmem:[%s475] sm:$0xff]
        %478 = vset.pattern.permute.xlu0 0
        %479 = vperm.xlu0 %478, %v476
        %v480 = vpop.permute.xlu0 %479
        %v483 = vlaneseq
        %v484 = vshrl.u32 %v483, 7
        %v485 = vsub.s32 0, %v484
        %v486 = vrot.slane %v474, %v485
        %v487 = vlaneseq
        %v488 = vshrl.u32 %v487, 7
        %v489 = vsub.s32 1, %v488
        %v490 = vrot.slane %v474, %v489
        %v493 = vmul.f32 %v480, %v486
        %v494 = vmul.f32 %v480, %v490
        %v495 = vadd.f32 %v446, %v493
        %v496 = vadd.f32 %v447, %v494
        %v497 = vld [vmem:[%s4] sm:$0xff]
        %499 = vset.pattern.permute.xlu0 0
        %500 = vperm.xlu0 %499, %v497
        %v501 = vpop.permute.xlu0 %500
        %v503 = vadd.f32 %v495, %v501
        %v504 = vadd.f32 %v496, %v501
        %vm505 = vcmp.gt.f32.partialorder %v503, 0.0
        %vm506 = vcmp.gt.f32.partialorder %v504, 0.0
        %v507 = vmul.f32 %v503, 0.01
        %v508 = vmul.f32 %v504, 0.01
        %v509 = vsel %vm505, %v503, %v507
        %v510 = vsel %vm506, %v504, %v508
        %511 = vst [vmem:[#allocation2] sm:$0xff] %v509
        %512 = vst [vmem:[#allocation2 + $0x8] sm:$0xff] %v510
        %v513 = vld [vmem:[#allocation2] ss:$8 sm:$0x3]
        %v515 = vlaneseq
        %v516 = vshrl.u32 %v515, 7
        %v517 = vsub.s32 0, %v516
        %v518 = vrot.slane %v513, %v517
        %v519 = vlaneseq
        %v520 = vshrl.u32 %v519, 7
        %v521 = vsub.s32 1, %v520
        %v522 = vrot.slane %v513, %v521
        %525 = vrot.lane.b32.xlu0 %v518, 32
        %v526 = vpop.permute.xlu0 %525
        %527 = vrot.lane.b32.xlu0 %v522, 32
        %v528 = vpop.permute.xlu0 %527
        %vm529 = vcmp.lt.s32.totalorder %v295, 32
        %v530 = vsel %vm529, %v526, %v528
        %v531 = vsel %vm529, %v528, %v526
        %v532 = vld [vmem:[#allocation3] sm:$0xf]
        %534 = vset.pattern.permute.xlu0 0
        %535 = vperm.xlu0 %534, %v532
        %v536 = vpop.permute.xlu0 %535
        %v538 = vlaneseq
        %v539 = vshrl.u32 %v538, 7
        %v540 = vsub.s32 0, %v539
        %v541 = vrot.slane %v531, %v540
        %v542 = vlaneseq
        %v543 = vshrl.u32 %v542, 7
        %v544 = vsub.s32 0, %v543
        %v545 = vrot.slane %v530, %v544
        %v546 = vmul.f32 %v536, %v541
        %v547 = vmul.f32 %v536, %v545
        %v548 = vadd.f32 %v546, 0.0
        %v549 = vadd.f32 %v547, 0.0
        %s550 = scalar_lea.vmem [#allocation2], 1
        %v551 = vld [vmem:[%s550] ss:$8 sm:$0x3]
        %v553 = vlaneseq
        %v554 = vshrl.u32 %v553, 7
        %v555 = vsub.s32 0, %v554
        %v556 = vrot.slane %v551, %v555
        %v557 = vlaneseq
        %v558 = vshrl.u32 %v557, 7
        %v559 = vsub.s32 1, %v558
        %v560 = vrot.slane %v551, %v559
        %563 = vrot.lane.b32.xlu0 %v556, 32
        %v564 = vpop.permute.xlu0 %563
        %565 = vrot.lane.b32.xlu0 %v560, 32
        %v566 = vpop.permute.xlu0 %565
        %v567 = vsel %vm529, %v564, %v566
        %v568 = vsel %vm529, %v566, %v564
        %s569 = scalar_lea.vmem [#allocation3], 4
        %v570 = vld [vmem:[%s569] sm:$0xf]
        %572 = vset.pattern.permute.xlu0 0
        %573 = vperm.xlu0 %572, %v570
        %v574 = vpop.permute.xlu0 %573
        %v576 = vlaneseq
        %v577 = vshrl.u32 %v576, 7
        %v578 = vsub.s32 0, %v577
        %v579 = vrot.slane %v568, %v578
        %v580 = vlaneseq
        %v581 = vshrl.u32 %v580, 7
        %v582 = vsub.s32 0, %v581
        %v583 = vrot.slane %v567, %v582
        %v584 = vmul.f32 %v574, %v579
        %v585 = vmul.f32 %v574, %v583
        %v586 = vadd.f32 %v548, %v584
        %v587 = vadd.f32 %v549, %v585
        %s588 = scalar_lea.vmem [#allocation2], 2
        %v589 = vld [vmem:[%s588] ss:$8 sm:$0x3]
        %v591 = vlaneseq
        %v592 = vshrl.u32 %v591, 7
        %v593 = vsub.s32 0, %v592
        %v594 = vrot.slane %v589, %v593
        %v595 = vlaneseq
        %v596 = vshrl.u32 %v595, 7
        %v597 = vsub.s32 1, %v596
        %v598 = vrot.slane %v589, %v597
        %601 = vrot.lane.b32.xlu0 %v594, 32
        %v602 = vpop.permute.xlu0 %601
        %603 = vrot.lane.b32.xlu0 %v598, 32
        %v604 = vpop.permute.xlu0 %603
        %v605 = vsel %vm529, %v602, %v604
        %v606 = vsel %vm529, %v604, %v602
        %s607 = scalar_lea.vmem [#allocation3], 8
        %v608 = vld [vmem:[%s607] sm:$0xf]
        %610 = vset.pattern.permute.xlu0 0
        %611 = vperm.xlu0 %610, %v608
        %v612 = vpop.permute.xlu0 %611
        %v614 = vlaneseq
        %v615 = vshrl.u32 %v614, 7
        %v616 = vsub.s32 0, %v615
        %v617 = vrot.slane %v606, %v616
        %v618 = vlaneseq
        %v619 = vshrl.u32 %v618, 7
        %v620 = vsub.s32 0, %v619
        %v621 = vrot.slane %v605, %v620
        %v622 = vmul.f32 %v612, %v617
        %v623 = vmul.f32 %v612, %v621
        %v624 = vadd.f32 %v586, %v622
        %v625 = vadd.f32 %v587, %v623
        %s626 = scalar_lea.vmem [#allocation2], 3
        %v627 = vld [vmem:[%s626] ss:$8 sm:$0x3]
        %v629 = vlaneseq
        %v630 = vshrl.u32 %v629, 7
        %v631 = vsub.s32 0, %v630
        %v632 = vrot.slane %v627, %v631
        %v633 = vlaneseq
        %v634 = vshrl.u32 %v633, 7
        %v635 = vsub.s32 1, %v634
        %v636 = vrot.slane %v627, %v635
        %639 = vrot.lane.b32.xlu0 %v632, 32
        %v640 = vpop.permute.xlu0 %639
        %641 = vrot.lane.b32.xlu0 %v636, 32
        %v642 = vpop.permute.xlu0 %641
        %v643 = vsel %vm529, %v640, %v642
        %v644 = vsel %vm529, %v642, %v640
        %s645 = scalar_lea.vmem [#allocation3], 12
        %v646 = vld [vmem:[%s645] sm:$0xf]
        %648 = vset.pattern.permute.xlu0 0
        %649 = vperm.xlu0 %648, %v646
        %v650 = vpop.permute.xlu0 %649
        %v652 = vlaneseq
        %v653 = vshrl.u32 %v652, 7
        %v654 = vsub.s32 0, %v653
        %v655 = vrot.slane %v644, %v654
        %v656 = vlaneseq
        %v657 = vshrl.u32 %v656, 7
        %v658 = vsub.s32 0, %v657
        %v659 = vrot.slane %v643, %v658
        %v660 = vmul.f32 %v650, %v655
        %v661 = vmul.f32 %v650, %v659
        %v662 = vadd.f32 %v624, %v660
        %v663 = vadd.f32 %v625, %v661
        %s664 = scalar_lea.vmem [#allocation2], 4
        %v665 = vld [vmem:[%s664] ss:$8 sm:$0x3]
        %v667 = vlaneseq
        %v668 = vshrl.u32 %v667, 7
        %v669 = vsub.s32 0, %v668
        %v670 = vrot.slane %v665, %v669
        %v671 = vlaneseq
        %v672 = vshrl.u32 %v671, 7
        %v673 = vsub.s32 1, %v672
        %v674 = vrot.slane %v665, %v673
        %677 = vrot.lane.b32.xlu0 %v670, 32
        %v678 = vpop.permute.xlu0 %677
        %679 = vrot.lane.b32.xlu0 %v674, 32
        %v680 = vpop.permute.xlu0 %679
        %v681 = vsel %vm529, %v678, %v680
        %v682 = vsel %vm529, %v680, %v678
        %s683 = scalar_lea.vmem [#allocation3], 16
        %v684 = vld [vmem:[%s683] sm:$0xf]
        %686 = vset.pattern.permute.xlu0 0
        %687 = vperm.xlu0 %686, %v684
        %v688 = vpop.permute.xlu0 %687
        %v690 = vlaneseq
        %v691 = vshrl.u32 %v690, 7
        %v692 = vsub.s32 0, %v691
        %v693 = vrot.slane %v682, %v692
        %v694 = vlaneseq
        %v695 = vshrl.u32 %v694, 7
        %v696 = vsub.s32 0, %v695
        %v697 = vrot.slane %v681, %v696
        %v698 = vmul.f32 %v688, %v693
        %v699 = vmul.f32 %v688, %v697
        %v700 = vadd.f32 %v662, %v698
        %v701 = vadd.f32 %v663, %v699
        %s702 = scalar_lea.vmem [#allocation2], 5
        %v703 = vld [vmem:[%s702] ss:$8 sm:$0x3]
        %v705 = vlaneseq
        %v706 = vshrl.u32 %v705, 7
        %v707 = vsub.s32 0, %v706
        %v708 = vrot.slane %v703, %v707
        %v709 = vlaneseq
        %v710 = vshrl.u32 %v709, 7
        %v711 = vsub.s32 1, %v710
        %v712 = vrot.slane %v703, %v711
        %715 = vrot.lane.b32.xlu0 %v708, 32
        %v716 = vpop.permute.xlu0 %715
        %717 = vrot.lane.b32.xlu0 %v712, 32
        %v718 = vpop.permute.xlu0 %717
        %v719 = vsel %vm529, %v716, %v718
        %v720 = vsel %vm529, %v718, %v716
        %s721 = scalar_lea.vmem [#allocation3], 20
        %v722 = vld [vmem:[%s721] sm:$0xf]
        %724 = vset.pattern.permute.xlu0 0
        %725 = vperm.xlu0 %724, %v722
        %v726 = vpop.permute.xlu0 %725
        %v728 = vlaneseq
        %v729 = vshrl.u32 %v728, 7
        %v730 = vsub.s32 0, %v729
        %v731 = vrot.slane %v720, %v730
        %v732 = vlaneseq
        %v733 = vshrl.u32 %v732, 7
        %v734 = vsub.s32 0, %v733
        %v735 = vrot.slane %v719, %v734
        %v736 = vmul.f32 %v726, %v731
        %v737 = vmul.f32 %v726, %v735
        %v738 = vadd.f32 %v700, %v736
        %v739 = vadd.f32 %v701, %v737
        %s740 = scalar_lea.vmem [#allocation2], 6
        %v741 = vld [vmem:[%s740] ss:$8 sm:$0x3]
        %v743 = vlaneseq
        %v744 = vshrl.u32 %v743, 7
        %v745 = vsub.s32 0, %v744
        %v746 = vrot.slane %v741, %v745
        %v747 = vlaneseq
        %v748 = vshrl.u32 %v747, 7
        %v749 = vsub.s32 1, %v748
        %v750 = vrot.slane %v741, %v749
        %753 = vrot.lane.b32.xlu0 %v746, 32
        %v754 = vpop.permute.xlu0 %753
        %755 = vrot.lane.b32.xlu0 %v750, 32
        %v756 = vpop.permute.xlu0 %755
        %v757 = vsel %vm529, %v754, %v756
        %v758 = vsel %vm529, %v756, %v754
        %s759 = scalar_lea.vmem [#allocation3], 24
        %v760 = vld [vmem:[%s759] sm:$0xf]
        %762 = vset.pattern.permute.xlu0 0
        %763 = vperm.xlu0 %762, %v760
        %v764 = vpop.permute.xlu0 %763
        %v766 = vlaneseq
        %v767 = vshrl.u32 %v766, 7
        %v768 = vsub.s32 0, %v767
        %v769 = vrot.slane %v758, %v768
        %v770 = vlaneseq
        %v771 = vshrl.u32 %v770, 7
        %v772 = vsub.s32 0, %v771
        %v773 = vrot.slane %v757, %v772
        %v774 = vmul.f32 %v764, %v769
        %v775 = vmul.f32 %v764, %v773
        %v776 = vadd.f32 %v738, %v774
        %v777 = vadd.f32 %v739, %v775
        %s778 = scalar_lea.vmem [#allocation2], 7
        %v779 = vld [vmem:[%s778] ss:$8 sm:$0x3]
        %v781 = vlaneseq
        %v782 = vshrl.u32 %v781, 7
        %v783 = vsub.s32 0, %v782
        %v784 = vrot.slane %v779, %v783
        %v785 = vlaneseq
        %v786 = vshrl.u32 %v785, 7
        %v787 = vsub.s32 1, %v786
        %v788 = vrot.slane %v779, %v787
        %791 = vrot.lane.b32.xlu0 %v784, 32
        %v792 = vpop.permute.xlu0 %791
        %793 = vrot.lane.b32.xlu0 %v788, 32
        %v794 = vpop.permute.xlu0 %793
        %v795 = vsel %vm529, %v792, %v794
        %v796 = vsel %vm529, %v794, %v792
        %s797 = scalar_lea.vmem [#allocation3], 28
        %v798 = vld [vmem:[%s797] sm:$0xf]
        %800 = vset.pattern.permute.xlu0 0
        %801 = vperm.xlu0 %800, %v798
        %v802 = vpop.permute.xlu0 %801
        %v804 = vlaneseq
        %v805 = vshrl.u32 %v804, 7
        %v806 = vsub.s32 0, %v805
        %v807 = vrot.slane %v796, %v806
        %v808 = vlaneseq
        %v809 = vshrl.u32 %v808, 7
        %v810 = vsub.s32 0, %v809
        %v811 = vrot.slane %v795, %v810
        %v812 = vmul.f32 %v802, %v807
        %v813 = vmul.f32 %v802, %v811
        %v814 = vadd.f32 %v776, %v812
        %v815 = vadd.f32 %v777, %v813
        %vm816 = vcmp.ge.s32.totalorder %v295, 32
        %vm817 = vcmp.ge.s32.totalorder %v296, 32
        %vm818 = vcmp.lt.s32.totalorder %v295, 256
        %vm819 = vcmp.lt.s32.totalorder %v296, 256
        %vm820 = vmand %vm816, %vm818
        %vm821 = vmand %vm817, %vm819
        %v822 = vsel %vm820, 1, 0
        %v823 = vsel %vm821, 1, 0
        %vm824 = vcmp.eq.s32.totalorder %v822, 1
        %vm825 = vcmp.eq.s32.totalorder %v823, 1
        %v826 = vsel %vm824, %v814, 0.0
        %v827 = vsel %vm825, %v815, 0.0
        %v828 = vadd.f32 %v826, 0.0
        %v829 = vadd.f32 %v827, 0.0
        %830 = vrot.lane.b32.xlu0 %v518, 16
        %v831 = vpop.permute.xlu0 %830
        %832 = vrot.lane.b32.xlu0 %v522, 16
        %v833 = vpop.permute.xlu0 %832
        %vm834 = vcmp.lt.s32.totalorder %v295, 16
        %v835 = vsel %vm834, %v831, %v833
        %v836 = vsel %vm834, %v833, %v831
        %s837 = scalar_lea.vmem [#allocation3], 32
        %v838 = vld [vmem:[%s837] sm:$0xf]
        %840 = vset.pattern.permute.xlu0 0
        %841 = vperm.xlu0 %840, %v838
        %v842 = vpop.permute.xlu0 %841
        %v844 = vlaneseq
        %v845 = vshrl.u32 %v844, 7
        %v846 = vsub.s32 0, %v845
        %v847 = vrot.slane %v836, %v846
        %v848 = vlaneseq
        %v849 = vshrl.u32 %v848, 7
        %v850 = vsub.s32 0, %v849
        %v851 = vrot.slane %v835, %v850
        %v852 = vmul.f32 %v842, %v847
        %v853 = vmul.f32 %v842, %v851
        %v854 = vadd.f32 %v852, 0.0
        %v855 = vadd.f32 %v853, 0.0
        %856 = vrot.lane.b32.xlu0 %v556, 16
        %v857 = vpop.permute.xlu0 %856
        %858 = vrot.lane.b32.xlu0 %v560, 16
        %v859 = vpop.permute.xlu0 %858
        %v860 = vsel %vm834, %v857, %v859
        %v861 = vsel %vm834, %v859, %v857
        %s862 = scalar_lea.vmem [#allocation3], 36
        %v863 = vld [vmem:[%s862] sm:$0xf]
        %865 = vset.pattern.permute.xlu0 0
        %866 = vperm.xlu0 %865, %v863
        %v867 = vpop.permute.xlu0 %866
        %v869 = vlaneseq
        %v870 = vshrl.u32 %v869, 7
        %v871 = vsub.s32 0, %v870
        %v872 = vrot.slane %v861, %v871
        %v873 = vlaneseq
        %v874 = vshrl.u32 %v873, 7
        %v875 = vsub.s32 0, %v874
        %v876 = vrot.slane %v860, %v875
        %v877 = vmul.f32 %v867, %v872
        %v878 = vmul.f32 %v867, %v876
        %v879 = vadd.f32 %v854, %v877
        %v880 = vadd.f32 %v855, %v878
        %881 = vrot.lane.b32.xlu0 %v594, 16
        %v882 = vpop.permute.xlu0 %881
        %883 = vrot.lane.b32.xlu0 %v598, 16
        %v884 = vpop.permute.xlu0 %883
        %v885 = vsel %vm834, %v882, %v884
        %v886 = vsel %vm834, %v884, %v882
        %s887 = scalar_lea.vmem [#allocation3], 40
        %v888 = vld [vmem:[%s887] sm:$0xf]
        %890 = vset.pattern.permute.xlu0 0
        %891 = vperm.xlu0 %890, %v888
        %v892 = vpop.permute.xlu0 %891
        %v894 = vlaneseq
        %v895 = vshrl.u32 %v894, 7
        %v896 = vsub.s32 0, %v895
        %v897 = vrot.slane %v886, %v896
        %v898 = vlaneseq
        %v899 = vshrl.u32 %v898, 7
        %v900 = vsub.s32 0, %v899
        %v901 = vrot.slane %v885, %v900
        %v902 = vmul.f32 %v892, %v897
        %v903 = vmul.f32 %v892, %v901
        %v904 = vadd.f32 %v879, %v902
        %v905 = vadd.f32 %v880, %v903
        %906 = vrot.lane.b32.xlu0 %v632, 16
        %v907 = vpop.permute.xlu0 %906
        %908 = vrot.lane.b32.xlu0 %v636, 16
        %v909 = vpop.permute.xlu0 %908
        %v910 = vsel %vm834, %v907, %v909
        %v911 = vsel %vm834, %v909, %v907
        %s912 = scalar_lea.vmem [#allocation3], 44
        %v913 = vld [vmem:[%s912] sm:$0xf]
        %915 = vset.pattern.permute.xlu0 0
        %916 = vperm.xlu0 %915, %v913
        %v917 = vpop.permute.xlu0 %916
        %v919 = vlaneseq
        %v920 = vshrl.u32 %v919, 7
        %v921 = vsub.s32 0, %v920
        %v922 = vrot.slane %v911, %v921
        %v923 = vlaneseq
        %v924 = vshrl.u32 %v923, 7
        %v925 = vsub.s32 0, %v924
        %v926 = vrot.slane %v910, %v925
        %v927 = vmul.f32 %v917, %v922
        %v928 = vmul.f32 %v917, %v926
        %v929 = vadd.f32 %v904, %v927
        %v930 = vadd.f32 %v905, %v928
        %931 = vrot.lane.b32.xlu0 %v670, 16
        %v932 = vpop.permute.xlu0 %931
        %933 = vrot.lane.b32.xlu0 %v674, 16
        %v934 = vpop.permute.xlu0 %933
        %v935 = vsel %vm834, %v932, %v934
        %v936 = vsel %vm834, %v934, %v932
        %s937 = scalar_lea.vmem [#allocation3], 48
        %v938 = vld [vmem:[%s937] sm:$0xf]
        %940 = vset.pattern.permute.xlu0 0
        %941 = vperm.xlu0 %940, %v938
        %v942 = vpop.permute.xlu0 %941
        %v944 = vlaneseq
        %v945 = vshrl.u32 %v944, 7
        %v946 = vsub.s32 0, %v945
        %v947 = vrot.slane %v936, %v946
        %v948 = vlaneseq
        %v949 = vshrl.u32 %v948, 7
        %v950 = vsub.s32 0, %v949
        %v951 = vrot.slane %v935, %v950
        %v952 = vmul.f32 %v942, %v947
        %v953 = vmul.f32 %v942, %v951
        %v954 = vadd.f32 %v929, %v952
        %v955 = vadd.f32 %v930, %v953
        %956 = vrot.lane.b32.xlu0 %v708, 16
        %v957 = vpop.permute.xlu0 %956
        %958 = vrot.lane.b32.xlu0 %v712, 16
        %v959 = vpop.permute.xlu0 %958
        %v960 = vsel %vm834, %v957, %v959
        %v961 = vsel %vm834, %v959, %v957
        %s962 = scalar_lea.vmem [#allocation3], 52
        %v963 = vld [vmem:[%s962] sm:$0xf]
        %965 = vset.pattern.permute.xlu0 0
        %966 = vperm.xlu0 %965, %v963
        %v967 = vpop.permute.xlu0 %966
        %v969 = vlaneseq
        %v970 = vshrl.u32 %v969, 7
        %v971 = vsub.s32 0, %v970
        %v972 = vrot.slane %v961, %v971
        %v973 = vlaneseq
        %v974 = vshrl.u32 %v973, 7
        %v975 = vsub.s32 0, %v974
        %v976 = vrot.slane %v960, %v975
        %v977 = vmul.f32 %v967, %v972
        %v978 = vmul.f32 %v967, %v976
        %v979 = vadd.f32 %v954, %v977
        %v980 = vadd.f32 %v955, %v978
        %981 = vrot.lane.b32.xlu0 %v746, 16
        %v982 = vpop.permute.xlu0 %981
        %983 = vrot.lane.b32.xlu0 %v750, 16
        %v984 = vpop.permute.xlu0 %983
        %v985 = vsel %vm834, %v982, %v984
        %v986 = vsel %vm834, %v984, %v982
        %s987 = scalar_lea.vmem [#allocation3], 56
        %v988 = vld [vmem:[%s987] sm:$0xf]
        %990 = vset.pattern.permute.xlu0 0
        %991 = vperm.xlu0 %990, %v988
        %v992 = vpop.permute.xlu0 %991
        %v994 = vlaneseq
        %v995 = vshrl.u32 %v994, 7
        %v996 = vsub.s32 0, %v995
        %v997 = vrot.slane %v986, %v996
        %v998 = vlaneseq
        %v999 = vshrl.u32 %v998, 7
        %v1000 = vsub.s32 0, %v999
        %v1001 = vrot.slane %v985, %v1000
        %v1002 = vmul.f32 %v992, %v997
        %v1003 = vmul.f32 %v992, %v1001
        %v1004 = vadd.f32 %v979, %v1002
        %v1005 = vadd.f32 %v980, %v1003
        %1006 = vrot.lane.b32.xlu0 %v784, 16
        %v1007 = vpop.permute.xlu0 %1006
        %1008 = vrot.lane.b32.xlu0 %v788, 16
        %v1009 = vpop.permute.xlu0 %1008
        %v1010 = vsel %vm834, %v1007, %v1009
        %v1011 = vsel %vm834, %v1009, %v1007
        %s1012 = scalar_lea.vmem [#allocation3], 60
        %v1013 = vld [vmem:[%s1012] sm:$0xf]
        %1015 = vset.pattern.permute.xlu0 0
        %1016 = vperm.xlu0 %1015, %v1013
        %v1017 = vpop.permute.xlu0 %1016
        %v1019 = vlaneseq
        %v1020 = vshrl.u32 %v1019, 7
        %v1021 = vsub.s32 0, %v1020
        %v1022 = vrot.slane %v1011, %v1021
        %v1023 = vlaneseq
        %v1024 = vshrl.u32 %v1023, 7
        %v1025 = vsub.s32 0, %v1024
        %v1026 = vrot.slane %v1010, %v1025
        %v1027 = vmul.f32 %v1017, %v1022
        %v1028 = vmul.f32 %v1017, %v1026
        %v1029 = vadd.f32 %v1004, %v1027
        %v1030 = vadd.f32 %v1005, %v1028
        %vm1031 = vcmp.ge.s32.totalorder %v295, 16
        %vm1032 = vcmp.ge.s32.totalorder %v296, 16
        %vm1033 = vmand %vm1031, %vm818
        %vm1034 = vmand %vm1032, %vm819
        %v1035 = vsel %vm1033, 1, 0
        %v1036 = vsel %vm1034, 1, 0
        %vm1037 = vcmp.eq.s32.totalorder %v1035, 1
        %vm1038 = vcmp.eq.s32.totalorder %v1036, 1
        %v1039 = vsel %vm1037, %v1029, 0.0
        %v1040 = vsel %vm1038, %v1030, 0.0
        %v1041 = vadd.f32 %v828, %v1039
        %v1042 = vadd.f32 %v829, %v1040
        %s1043 = scalar_lea.vmem [#allocation3], 64
        %v1044 = vld [vmem:[%s1043] sm:$0xf]
        %1046 = vset.pattern.permute.xlu0 0
        %1047 = vperm.xlu0 %1046, %v1044
        %v1048 = vpop.permute.xlu0 %1047
        %v1050 = vmul.f32 %v1048, %v518
        %v1051 = vmul.f32 %v1048, %v522
        %v1052 = vadd.f32 %v1050, 0.0
        %v1053 = vadd.f32 %v1051, 0.0
        %s1054 = scalar_lea.vmem [#allocation3], 68
        %v1055 = vld [vmem:[%s1054] sm:$0xf]
        %1057 = vset.pattern.permute.xlu0 0
        %1058 = vperm.xlu0 %1057, %v1055
        %v1059 = vpop.permute.xlu0 %1058
        %v1061 = vmul.f32 %v1059, %v556
        %v1062 = vmul.f32 %v1059, %v560
        %v1063 = vadd.f32 %v1052, %v1061
        %v1064 = vadd.f32 %v1053, %v1062
        %s1065 = scalar_lea.vmem [#allocation3], 72
        %v1066 = vld [vmem:[%s1065] sm:$0xf]
        %1068 = vset.pattern.permute.xlu0 0
        %1069 = vperm.xlu0 %1068, %v1066
        %v1070 = vpop.permute.xlu0 %1069
        %v1072 = vmul.f32 %v1070, %v594
        %v1073 = vmul.f32 %v1070, %v598
        %v1074 = vadd.f32 %v1063, %v1072
        %v1075 = vadd.f32 %v1064, %v1073
        %s1076 = scalar_lea.vmem [#allocation3], 76
        %v1077 = vld [vmem:[%s1076] sm:$0xf]
        %1079 = vset.pattern.permute.xlu0 0
        %1080 = vperm.xlu0 %1079, %v1077
        %v1081 = vpop.permute.xlu0 %1080
        %v1083 = vmul.f32 %v1081, %v632
        %v1084 = vmul.f32 %v1081, %v636
        %v1085 = vadd.f32 %v1074, %v1083
        %v1086 = vadd.f32 %v1075, %v1084
        %s1087 = scalar_lea.vmem [#allocation3], 80
        %v1088 = vld [vmem:[%s1087] sm:$0xf]
        %1090 = vset.pattern.permute.xlu0 0
        %1091 = vperm.xlu0 %1090, %v1088
        %v1092 = vpop.permute.xlu0 %1091
        %v1094 = vmul.f32 %v1092, %v670
        %v1095 = vmul.f32 %v1092, %v674
        %v1096 = vadd.f32 %v1085, %v1094
        %v1097 = vadd.f32 %v1086, %v1095
        %s1098 = scalar_lea.vmem [#allocation3], 84
        %v1099 = vld [vmem:[%s1098] sm:$0xf]
        %1101 = vset.pattern.permute.xlu0 0
        %1102 = vperm.xlu0 %1101, %v1099
        %v1103 = vpop.permute.xlu0 %1102
        %v1105 = vmul.f32 %v1103, %v708
        %v1106 = vmul.f32 %v1103, %v712
        %v1107 = vadd.f32 %v1096, %v1105
        %v1108 = vadd.f32 %v1097, %v1106
        %s1109 = scalar_lea.vmem [#allocation3], 88
        %v1110 = vld [vmem:[%s1109] sm:$0xf]
        %1112 = vset.pattern.permute.xlu0 0
        %1113 = vperm.xlu0 %1112, %v1110
        %v1114 = vpop.permute.xlu0 %1113
        %v1116 = vmul.f32 %v1114, %v746
        %v1117 = vmul.f32 %v1114, %v750
        %v1118 = vadd.f32 %v1107, %v1116
        %v1119 = vadd.f32 %v1108, %v1117
        %s1120 = scalar_lea.vmem [#allocation3], 92
        %v1121 = vld [vmem:[%s1120] sm:$0xf]
        %1123 = vset.pattern.permute.xlu0 0
        %1124 = vperm.xlu0 %1123, %v1121
        %v1125 = vpop.permute.xlu0 %1124
        %v1127 = vmul.f32 %v1125, %v784
        %v1128 = vmul.f32 %v1125, %v788
        %v1129 = vadd.f32 %v1118, %v1127
        %v1130 = vadd.f32 %v1119, %v1128
        %v1131 = vadd.f32 %v1041, %v1129
        %v1132 = vadd.f32 %v1042, %v1130
        %1133 = vrot.lane.b32.xlu0 %v518, 112
        %v1134 = vpop.permute.xlu0 %1133
        %1135 = vrot.lane.b32.xlu0 %v522, 112
        %v1136 = vpop.permute.xlu0 %1135
        %vm1137 = vcmp.lt.s32.totalorder %v295, 112
        %v1138 = vsel %vm1137, %v1134, %v1136
        %v1139 = vsel %vm1137, %v1136, %v1134
        %s1140 = scalar_lea.vmem [#allocation3], 96
        %v1141 = vld [vmem:[%s1140] sm:$0xf]
        %1143 = vset.pattern.permute.xlu0 0
        %1144 = vperm.xlu0 %1143, %v1141
        %v1145 = vpop.permute.xlu0 %1144
        %v1147 = vlaneseq
        %v1148 = vshrl.u32 %v1147, 7
        %v1149 = vsub.s32 0, %v1148
        %v1150 = vrot.slane %v1138, %v1149
        %v1151 = vlaneseq
        %v1152 = vshrl.u32 %v1151, 7
        %v1153 = vsub.s32 0, %v1152
        %v1154 = vrot.slane %v1139, %v1153
        %v1155 = vmul.f32 %v1145, %v1150
        %v1156 = vmul.f32 %v1145, %v1154
        %v1157 = vadd.f32 %v1155, 0.0
        %v1158 = vadd.f32 %v1156, 0.0
        %1159 = vrot.lane.b32.xlu0 %v556, 112
        %v1160 = vpop.permute.xlu0 %1159
        %1161 = vrot.lane.b32.xlu0 %v560, 112
        %v1162 = vpop.permute.xlu0 %1161
        %v1163 = vsel %vm1137, %v1160, %v1162
        %v1164 = vsel %vm1137, %v1162, %v1160
        %s1165 = scalar_lea.vmem [#allocation3], 100
        %v1166 = vld [vmem:[%s1165] sm:$0xf]
        %1168 = vset.pattern.permute.xlu0 0
        %1169 = vperm.xlu0 %1168, %v1166
        %v1170 = vpop.permute.xlu0 %1169
        %v1172 = vlaneseq
        %v1173 = vshrl.u32 %v1172, 7
        %v1174 = vsub.s32 0, %v1173
        %v1175 = vrot.slane %v1163, %v1174
        %v1176 = vlaneseq
        %v1177 = vshrl.u32 %v1176, 7
        %v1178 = vsub.s32 0, %v1177
        %v1179 = vrot.slane %v1164, %v1178
        %v1180 = vmul.f32 %v1170, %v1175
        %v1181 = vmul.f32 %v1170, %v1179
        %v1182 = vadd.f32 %v1157, %v1180
        %v1183 = vadd.f32 %v1158, %v1181
        %1184 = vrot.lane.b32.xlu0 %v594, 112
        %v1185 = vpop.permute.xlu0 %1184
        %1186 = vrot.lane.b32.xlu0 %v598, 112
        %v1187 = vpop.permute.xlu0 %1186
        %v1188 = vsel %vm1137, %v1185, %v1187
        %v1189 = vsel %vm1137, %v1187, %v1185
        %s1190 = scalar_lea.vmem [#allocation3], 104
        %v1191 = vld [vmem:[%s1190] sm:$0xf]
        %1193 = vset.pattern.permute.xlu0 0
        %1194 = vperm.xlu0 %1193, %v1191
        %v1195 = vpop.permute.xlu0 %1194
        %v1197 = vlaneseq
        %v1198 = vshrl.u32 %v1197, 7
        %v1199 = vsub.s32 0, %v1198
        %v1200 = vrot.slane %v1188, %v1199
        %v1201 = vlaneseq
        %v1202 = vshrl.u32 %v1201, 7
        %v1203 = vsub.s32 0, %v1202
        %v1204 = vrot.slane %v1189, %v1203
        %v1205 = vmul.f32 %v1195, %v1200
        %v1206 = vmul.f32 %v1195, %v1204
        %v1207 = vadd.f32 %v1182, %v1205
        %v1208 = vadd.f32 %v1183, %v1206
        %1209 = vrot.lane.b32.xlu0 %v632, 112
        %v1210 = vpop.permute.xlu0 %1209
        %1211 = vrot.lane.b32.xlu0 %v636, 112
        %v1212 = vpop.permute.xlu0 %1211
        %v1213 = vsel %vm1137, %v1210, %v1212
        %v1214 = vsel %vm1137, %v1212, %v1210
        %s1215 = scalar_lea.vmem [#allocation3], 108
        %v1216 = vld [vmem:[%s1215] sm:$0xf]
        %1218 = vset.pattern.permute.xlu0 0
        %1219 = vperm.xlu0 %1218, %v1216
        %v1220 = vpop.permute.xlu0 %1219
        %v1222 = vlaneseq
        %v1223 = vshrl.u32 %v1222, 7
        %v1224 = vsub.s32 0, %v1223
        %v1225 = vrot.slane %v1213, %v1224
        %v1226 = vlaneseq
        %v1227 = vshrl.u32 %v1226, 7
        %v1228 = vsub.s32 0, %v1227
        %v1229 = vrot.slane %v1214, %v1228
        %v1230 = vmul.f32 %v1220, %v1225
        %v1231 = vmul.f32 %v1220, %v1229
        %v1232 = vadd.f32 %v1207, %v1230
        %v1233 = vadd.f32 %v1208, %v1231
        %1234 = vrot.lane.b32.xlu0 %v670, 112
        %v1235 = vpop.permute.xlu0 %1234
        %1236 = vrot.lane.b32.xlu0 %v674, 112
        %v1237 = vpop.permute.xlu0 %1236
        %v1238 = vsel %vm1137, %v1235, %v1237
        %v1239 = vsel %vm1137, %v1237, %v1235
        %s1240 = scalar_lea.vmem [#allocation3], 112
        %v1241 = vld [vmem:[%s1240] sm:$0xf]
        %1243 = vset.pattern.permute.xlu0 0
        %1244 = vperm.xlu0 %1243, %v1241
        %v1245 = vpop.permute.xlu0 %1244
        %v1247 = vlaneseq
        %v1248 = vshrl.u32 %v1247, 7
        %v1249 = vsub.s32 0, %v1248
        %v1250 = vrot.slane %v1238, %v1249
        %v1251 = vlaneseq
        %v1252 = vshrl.u32 %v1251, 7
        %v1253 = vsub.s32 0, %v1252
        %v1254 = vrot.slane %v1239, %v1253
        %v1255 = vmul.f32 %v1245, %v1250
        %v1256 = vmul.f32 %v1245, %v1254
        %v1257 = vadd.f32 %v1232, %v1255
        %v1258 = vadd.f32 %v1233, %v1256
        %1259 = vrot.lane.b32.xlu0 %v708, 112
        %v1260 = vpop.permute.xlu0 %1259
        %1261 = vrot.lane.b32.xlu0 %v712, 112
        %v1262 = vpop.permute.xlu0 %1261
        %v1263 = vsel %vm1137, %v1260, %v1262
        %v1264 = vsel %vm1137, %v1262, %v1260
        %s1265 = scalar_lea.vmem [#allocation3], 116
        %v1266 = vld [vmem:[%s1265] sm:$0xf]
        %1268 = vset.pattern.permute.xlu0 0
        %1269 = vperm.xlu0 %1268, %v1266
        %v1270 = vpop.permute.xlu0 %1269
        %v1272 = vlaneseq
        %v1273 = vshrl.u32 %v1272, 7
        %v1274 = vsub.s32 0, %v1273
        %v1275 = vrot.slane %v1263, %v1274
        %v1276 = vlaneseq
        %v1277 = vshrl.u32 %v1276, 7
        %v1278 = vsub.s32 0, %v1277
        %v1279 = vrot.slane %v1264, %v1278
        %v1280 = vmul.f32 %v1270, %v1275
        %v1281 = vmul.f32 %v1270, %v1279
        %v1282 = vadd.f32 %v1257, %v1280
        %v1283 = vadd.f32 %v1258, %v1281
        %1284 = vrot.lane.b32.xlu0 %v746, 112
        %v1285 = vpop.permute.xlu0 %1284
        %1286 = vrot.lane.b32.xlu0 %v750, 112
        %v1287 = vpop.permute.xlu0 %1286
        %v1288 = vsel %vm1137, %v1285, %v1287
        %v1289 = vsel %vm1137, %v1287, %v1285
        %s1290 = scalar_lea.vmem [#allocation3], 120
        %v1291 = vld [vmem:[%s1290] sm:$0xf]
        %1293 = vset.pattern.permute.xlu0 0
        %1294 = vperm.xlu0 %1293, %v1291
        %v1295 = vpop.permute.xlu0 %1294
        %v1297 = vlaneseq
        %v1298 = vshrl.u32 %v1297, 7
        %v1299 = vsub.s32 0, %v1298
        %v1300 = vrot.slane %v1288, %v1299
        %v1301 = vlaneseq
        %v1302 = vshrl.u32 %v1301, 7
        %v1303 = vsub.s32 0, %v1302
        %v1304 = vrot.slane %v1289, %v1303
        %v1305 = vmul.f32 %v1295, %v1300
        %v1306 = vmul.f32 %v1295, %v1304
        %v1307 = vadd.f32 %v1282, %v1305
        %v1308 = vadd.f32 %v1283, %v1306
        %1309 = vrot.lane.b32.xlu0 %v784, 112
        %v1310 = vpop.permute.xlu0 %1309
        %1311 = vrot.lane.b32.xlu0 %v788, 112
        %v1312 = vpop.permute.xlu0 %1311
        %v1313 = vsel %vm1137, %v1310, %v1312
        %v1314 = vsel %vm1137, %v1312, %v1310
        %s1315 = scalar_lea.vmem [#allocation3], 124
        %v1316 = vld [vmem:[%s1315] sm:$0xf]
        %1318 = vset.pattern.permute.xlu0 0
        %1319 = vperm.xlu0 %1318, %v1316
        %v1320 = vpop.permute.xlu0 %1319
        %v1322 = vlaneseq
        %v1323 = vshrl.u32 %v1322, 7
        %v1324 = vsub.s32 0, %v1323
        %v1325 = vrot.slane %v1313, %v1324
        %v1326 = vlaneseq
        %v1327 = vshrl.u32 %v1326, 7
        %v1328 = vsub.s32 0, %v1327
        %v1329 = vrot.slane %v1314, %v1328
        %v1330 = vmul.f32 %v1320, %v1325
        %v1331 = vmul.f32 %v1320, %v1329
        %v1332 = vadd.f32 %v1307, %v1330
        %v1333 = vadd.f32 %v1308, %v1331
        %vm1334 = vcmp.ge.s32.totalorder %v295, 0
        %vm1335 = vcmp.ge.s32.totalorder %v296, 0
        %vm1336 = vcmp.lt.s32.totalorder %v295, 240
        %vm1337 = vcmp.lt.s32.totalorder %v296, 240
        %vm1338 = vmand %vm1334, %vm1336
        %vm1339 = vmand %vm1335, %vm1337
        %v1340 = vsel %vm1338, 1, 0
        %v1341 = vsel %vm1339, 1, 0
        %vm1342 = vcmp.eq.s32.totalorder %v1340, 1
        %vm1343 = vcmp.eq.s32.totalorder %v1341, 1
        %v1344 = vsel %vm1342, %v1332, 0.0
        %v1345 = vsel %vm1343, %v1333, 0.0
        %v1346 = vadd.f32 %v1131, %v1344
        %v1347 = vadd.f32 %v1132, %v1345
        %1348 = vrot.lane.b32.xlu0 %v518, 96
        %v1349 = vpop.permute.xlu0 %1348
        %1350 = vrot.lane.b32.xlu0 %v522, 96
        %v1351 = vpop.permute.xlu0 %1350
        %vm1352 = vcmp.lt.s32.totalorder %v295, 96
        %v1353 = vsel %vm1352, %v1349, %v1351
        %v1354 = vsel %vm1352, %v1351, %v1349
        %s1355 = scalar_lea.vmem [#allocation3], 128
        %v1356 = vld [vmem:[%s1355] sm:$0xf]
        %1358 = vset.pattern.permute.xlu0 0
        %1359 = vperm.xlu0 %1358, %v1356
        %v1360 = vpop.permute.xlu0 %1359
        %v1362 = vlaneseq
        %v1363 = vshrl.u32 %v1362, 7
        %v1364 = vsub.s32 0, %v1363
        %v1365 = vrot.slane %v1353, %v1364
        %v1366 = vlaneseq
        %v1367 = vshrl.u32 %v1366, 7
        %v1368 = vsub.s32 0, %v1367
        %v1369 = vrot.slane %v1354, %v1368
        %v1370 = vmul.f32 %v1360, %v1365
        %v1371 = vmul.f32 %v1360, %v1369
        %v1372 = vadd.f32 %v1370, 0.0
        %v1373 = vadd.f32 %v1371, 0.0
        %1374 = vrot.lane.b32.xlu0 %v556, 96
        %v1375 = vpop.permute.xlu0 %1374
        %1376 = vrot.lane.b32.xlu0 %v560, 96
        %v1377 = vpop.permute.xlu0 %1376
        %v1378 = vsel %vm1352, %v1375, %v1377
        %v1379 = vsel %vm1352, %v1377, %v1375
        %s1380 = scalar_lea.vmem [#allocation3], 132
        %v1381 = vld [vmem:[%s1380] sm:$0xf]
        %1383 = vset.pattern.permute.xlu0 0
        %1384 = vperm.xlu0 %1383, %v1381
        %v1385 = vpop.permute.xlu0 %1384
        %v1387 = vlaneseq
        %v1388 = vshrl.u32 %v1387, 7
        %v1389 = vsub.s32 0, %v1388
        %v1390 = vrot.slane %v1378, %v1389
        %v1391 = vlaneseq
        %v1392 = vshrl.u32 %v1391, 7
        %v1393 = vsub.s32 0, %v1392
        %v1394 = vrot.slane %v1379, %v1393
        %v1395 = vmul.f32 %v1385, %v1390
        %v1396 = vmul.f32 %v1385, %v1394
        %v1397 = vadd.f32 %v1372, %v1395
        %v1398 = vadd.f32 %v1373, %v1396
        %1399 = vrot.lane.b32.xlu0 %v594, 96
        %v1400 = vpop.permute.xlu0 %1399
        %1401 = vrot.lane.b32.xlu0 %v598, 96
        %v1402 = vpop.permute.xlu0 %1401
        %v1403 = vsel %vm1352, %v1400, %v1402
        %v1404 = vsel %vm1352, %v1402, %v1400
        %s1405 = scalar_lea.vmem [#allocation3], 136
        %v1406 = vld [vmem:[%s1405] sm:$0xf]
        %1408 = vset.pattern.permute.xlu0 0
        %1409 = vperm.xlu0 %1408, %v1406
        %v1410 = vpop.permute.xlu0 %1409
        %v1412 = vlaneseq
        %v1413 = vshrl.u32 %v1412, 7
        %v1414 = vsub.s32 0, %v1413
        %v1415 = vrot.slane %v1403, %v1414
        %v1416 = vlaneseq
        %v1417 = vshrl.u32 %v1416, 7
        %v1418 = vsub.s32 0, %v1417
        %v1419 = vrot.slane %v1404, %v1418
        %v1420 = vmul.f32 %v1410, %v1415
        %v1421 = vmul.f32 %v1410, %v1419
        %v1422 = vadd.f32 %v1397, %v1420
        %v1423 = vadd.f32 %v1398, %v1421
        %1424 = vrot.lane.b32.xlu0 %v632, 96
        %v1425 = vpop.permute.xlu0 %1424
        %1426 = vrot.lane.b32.xlu0 %v636, 96
        %v1427 = vpop.permute.xlu0 %1426
        %v1428 = vsel %vm1352, %v1425, %v1427
        %v1429 = vsel %vm1352, %v1427, %v1425
        %s1430 = scalar_lea.vmem [#allocation3], 140
        %v1431 = vld [vmem:[%s1430] sm:$0xf]
        %1433 = vset.pattern.permute.xlu0 0
        %1434 = vperm.xlu0 %1433, %v1431
        %v1435 = vpop.permute.xlu0 %1434
        %v1437 = vlaneseq
        %v1438 = vshrl.u32 %v1437, 7
        %v1439 = vsub.s32 0, %v1438
        %v1440 = vrot.slane %v1428, %v1439
        %v1441 = vlaneseq
        %v1442 = vshrl.u32 %v1441, 7
        %v1443 = vsub.s32 0, %v1442
        %v1444 = vrot.slane %v1429, %v1443
        %v1445 = vmul.f32 %v1435, %v1440
        %v1446 = vmul.f32 %v1435, %v1444
        %v1447 = vadd.f32 %v1422, %v1445
        %v1448 = vadd.f32 %v1423, %v1446
        %1449 = vrot.lane.b32.xlu0 %v670, 96
        %v1450 = vpop.permute.xlu0 %1449
        %1451 = vrot.lane.b32.xlu0 %v674, 96
        %v1452 = vpop.permute.xlu0 %1451
        %v1453 = vsel %vm1352, %v1450, %v1452
        %v1454 = vsel %vm1352, %v1452, %v1450
        %s1455 = scalar_lea.vmem [#allocation3], 144
        %v1456 = vld [vmem:[%s1455] sm:$0xf]
        %1458 = vset.pattern.permute.xlu0 0
        %1459 = vperm.xlu0 %1458, %v1456
        %v1460 = vpop.permute.xlu0 %1459
        %v1462 = vlaneseq
        %v1463 = vshrl.u32 %v1462, 7
        %v1464 = vsub.s32 0, %v1463
        %v1465 = vrot.slane %v1453, %v1464
        %v1466 = vlaneseq
        %v1467 = vshrl.u32 %v1466, 7
        %v1468 = vsub.s32 0, %v1467
        %v1469 = vrot.slane %v1454, %v1468
        %v1470 = vmul.f32 %v1460, %v1465
        %v1471 = vmul.f32 %v1460, %v1469
        %v1472 = vadd.f32 %v1447, %v1470
        %v1473 = vadd.f32 %v1448, %v1471
        %1474 = vrot.lane.b32.xlu0 %v708, 96
        %v1475 = vpop.permute.xlu0 %1474
        %1476 = vrot.lane.b32.xlu0 %v712, 96
        %v1477 = vpop.permute.xlu0 %1476
        %v1478 = vsel %vm1352, %v1475, %v1477
        %v1479 = vsel %vm1352, %v1477, %v1475
        %s1480 = scalar_lea.vmem [#allocation3], 148
        %v1481 = vld [vmem:[%s1480] sm:$0xf]
        %1483 = vset.pattern.permute.xlu0 0
        %1484 = vperm.xlu0 %1483, %v1481
        %v1485 = vpop.permute.xlu0 %1484
        %v1487 = vlaneseq
        %v1488 = vshrl.u32 %v1487, 7
        %v1489 = vsub.s32 0, %v1488
        %v1490 = vrot.slane %v1478, %v1489
        %v1491 = vlaneseq
        %v1492 = vshrl.u32 %v1491, 7
        %v1493 = vsub.s32 0, %v1492
        %v1494 = vrot.slane %v1479, %v1493
        %v1495 = vmul.f32 %v1485, %v1490
        %v1496 = vmul.f32 %v1485, %v1494
        %v1497 = vadd.f32 %v1472, %v1495
        %v1498 = vadd.f32 %v1473, %v1496
        %1499 = vrot.lane.b32.xlu0 %v746, 96
        %v1500 = vpop.permute.xlu0 %1499
        %1501 = vrot.lane.b32.xlu0 %v750, 96
        %v1502 = vpop.permute.xlu0 %1501
        %v1503 = vsel %vm1352, %v1500, %v1502
        %v1504 = vsel %vm1352, %v1502, %v1500
        %s1505 = scalar_lea.vmem [#allocation3], 152
        %v1506 = vld [vmem:[%s1505] sm:$0xf]
        %1508 = vset.pattern.permute.xlu0 0
        %1509 = vperm.xlu0 %1508, %v1506
        %v1510 = vpop.permute.xlu0 %1509
        %v1512 = vlaneseq
        %v1513 = vshrl.u32 %v1512, 7
        %v1514 = vsub.s32 0, %v1513
        %v1515 = vrot.slane %v1503, %v1514
        %v1516 = vlaneseq
        %v1517 = vshrl.u32 %v1516, 7
        %v1518 = vsub.s32 0, %v1517
        %v1519 = vrot.slane %v1504, %v1518
        %v1520 = vmul.f32 %v1510, %v1515
        %v1521 = vmul.f32 %v1510, %v1519
        %v1522 = vadd.f32 %v1497, %v1520
        %v1523 = vadd.f32 %v1498, %v1521
        %1524 = vrot.lane.b32.xlu0 %v784, 96
        %v1525 = vpop.permute.xlu0 %1524
        %1526 = vrot.lane.b32.xlu0 %v788, 96
        %v1527 = vpop.permute.xlu0 %1526
        %v1528 = vsel %vm1352, %v1525, %v1527
        %v1529 = vsel %vm1352, %v1527, %v1525
        %s1530 = scalar_lea.vmem [#allocation3], 156
        %v1531 = vld [vmem:[%s1530] sm:$0xf]
        %1533 = vset.pattern.permute.xlu0 0
        %1534 = vperm.xlu0 %1533, %v1531
        %v1535 = vpop.permute.xlu0 %1534
        %v1537 = vlaneseq
        %v1538 = vshrl.u32 %v1537, 7
        %v1539 = vsub.s32 0, %v1538
        %v1540 = vrot.slane %v1528, %v1539
        %v1541 = vlaneseq
        %v1542 = vshrl.u32 %v1541, 7
        %v1543 = vsub.s32 0, %v1542
        %v1544 = vrot.slane %v1529, %v1543
        %v1545 = vmul.f32 %v1535, %v1540
        %v1546 = vmul.f32 %v1535, %v1544
        %v1547 = vadd.f32 %v1522, %v1545
        %v1548 = vadd.f32 %v1523, %v1546
        %vm1549 = vcmp.lt.s32.totalorder %v295, 224
        %vm1550 = vcmp.lt.s32.totalorder %v296, 224
        %vm1551 = vmand %vm1334, %vm1549
        %vm1552 = vmand %vm1335, %vm1550
        %v1553 = vsel %vm1551, 1, 0
        %v1554 = vsel %vm1552, 1, 0
        %vm1555 = vcmp.eq.s32.totalorder %v1553, 1
        %vm1556 = vcmp.eq.s32.totalorder %v1554, 1
        %v1557 = vsel %vm1555, %v1547, 0.0
        %v1558 = vsel %vm1556, %v1548, 0.0
        %v1559 = vadd.f32 %v1346, %v1557
        %v1560 = vadd.f32 %v1347, %v1558
        %v1561 = vld [vmem:[%s6] sm:$0xf]
        %1563 = vset.pattern.permute.xlu0 0
        %1564 = vperm.xlu0 %1563, %v1561
        %v1565 = vpop.permute.xlu0 %1564
        %v1567 = vadd.f32 %v1559, %v1565
        %v1568 = vadd.f32 %v1560, %v1565
        %v1571 = vrot.slane %v1567, 4
        %v1572 = vrot.slane %v1568, 4
        %1575 = vst [vmem:[%s293] sm:$0xf0] %v1571
        %1576 = vst [vmem:[%s293 + $0x8] sm:$0xf0] %v1572
        %p1577 = scmp.lt.s32.totalorder %s19, 1
        %s1578 = scalar_select %p1577, %s19, 1
        %s1579 = smul.addr %s1578, 2
        %s1580 = smul.addr %s1579, 8
        %s1581 = scalar_lea.vmem %s7, %s1580
        // Predicated region
        $region53: #{dense_filter_forward.1} parent=47 // pred_check
          %p1582 = pneg %p189
        $region54: #{dense_filter_forward.1} parent=47 // pred_check_branch
          %1584 = sbr.rel (%p1582) target = $region56
        $region55: #{dense_filter_forward.1} parent=47 // pred_region
          _
        $region56: #{dense_filter_forward.1} parent=47 // pred_fallthru
          _
      $region48: #{dense_filter_forward.1} parent=5 // pred_fallthru
        _
      %p1585 = scmp.le.s32.totalorder 2, %s14
      // Predicated region
      $region57: #{dense_filter_forward.1} parent=5 // pred_check
        %p1586 = pneg %p1585
      $region58: #{dense_filter_forward.1} parent=5 // pred_check_branch
        %1588 = sbr.rel (%p1586) target = $region60
      $region59: #{dense_filter_forward.1} parent=5 // pred_region
        %s1589 = ssub.s32 %s14, 2
        // Predicated region
        $region61: #{dense_filter_forward.1} parent=59 // pred_check
          %p1590 = pneg %p195
        $region62: #{dense_filter_forward.1} parent=59 // pred_check_branch
          %1592 = sbr.rel (%p1590) target = $region64
        $region63: #{dense_filter_forward.1} parent=59 // pred_region
          %p1593 = scmp.lt.s32.totalorder %s20, 1
          %s1594 = scalar_select %p1593, %s20, 1
          %s1595 = smul.addr %s1594, 2
          %s1596 = smul.addr %s1595, 8
          %s1597 = scalar_lea.vmem %s7, %s1596
        $region64: #{dense_filter_forward.1} parent=59 // pred_fallthru
          _
      $region60: #{dense_filter_forward.1} parent=5 // pred_fallthru
        _
    $region6: #{dense_filter_forward.1} parent=1 // loop_footer
      %s18 = sadd.s32 1, %s14
    $region7: #{dense_filter_forward.1} parent=1 // loop_footer_branch
      %13 = sbr.rel target = $region3
    $region8: #{dense_filter_forward.1} parent=1 // loop_exit
      _
    %1598 = vsyncpa [#allocation4], 1
    %s1599 = scalar_lea.sflag [#allocation4], 1
    %1600 = vsyncpa %s1599, 1

</llo_original>
